<compile_context>
chip_gen: v7x
topology: tpu7x:2x2x1
jax: 0.10.0
libtpu: 0.0.40
codegen_flags: <defaults>
</compile_context>

<pallas_src>
import functools

import jax
import jax.numpy as jnp
from jax.experimental import pallas as pl
from jax.experimental.pallas import tpu as pltpu


def _round_up(x, m):
    return ((x + m - 1) // m) * m


def _prefer_split_taps():
    """v2-v5 MXUs are 128 deep: the fused K=2*Cp push gains nothing there while
    its lane concatenate costs a full-slab copy, so split the taps into two
    accumulating K=Cp matmuls.  v6e/v7x (256-deep MXU) keep the fused form."""
    try:
        kind = jax.devices()[0].device_kind.lower()
    except Exception:
        return False
    if "v6" in kind or "v7" in kind:
        return False
    return any(t in kind for t in ("v2", "v3", "v4", "v5"))


# --------------------------------------------------------------------------
# Fused kernel: all TemporalBlocks + linear1 + sigmoid for one batch tile.
# --------------------------------------------------------------------------
def fused_tcn_kernel(*refs, num_layers, pad, hdr, t_tot, seq_len,
                     split_taps, has_downsample):
    if has_downsample:
        (x_ref, mask_ref, w1_ref, b1_ref, w2_ref, b2_ref,
         wd_ref, bd_ref, hw_ref, hb_ref, o_ref, slab_ref) = refs
    else:
        (x_ref, mask_ref, w1_ref, b1_ref, w2_ref, b2_ref,
         hw_ref, hb_ref, o_ref, slab_ref) = refs
        wd_ref = bd_ref = None

    m_rows, c_pad = x_ref.shape          # M = Bb * t_tot flattened batch-tile rows
    bb = m_rows // t_tot

    # Persistent VMEM activation slab: hdr zero rows (valid history for the
    # element at the top of the flattened tile) + M activation rows, updated in
    # place each layer.
    slab_ref[0:hdr, :] = jnp.zeros((hdr, c_pad), jnp.float32)
    slab_ref[hdr:hdr + m_rows, :] = x_ref[...].astype(jnp.float32)

    # (M, 1) mask: 1.0 on each element's real rows [pad, pad+L), 0.0 on its
    # causal pad rows and 8-alignment tail.  Re-applied every layer so pad rows
    # stay exact zeros (required for causality of the shifted taps).
    mask = mask_ref[...]

    def conv(prev_bf, cur_bf, w, b):
        # w: (2*Cp, Cp) bf16 -- rows [0,Cp) act on x[t-d], rows [Cp,2Cp) on x[t].
        if split_taps:
            acc = (jnp.dot(prev_bf, w[:c_pad, :], preferred_element_type=jnp.float32)
                   + jnp.dot(cur_bf, w[c_pad:, :], preferred_element_type=jnp.float32))
        else:
            acc = jnp.dot(jnp.concatenate([prev_bf, cur_bf], axis=-1), w,
                          preferred_element_type=jnp.float32)
        return acc + b

    y = None
    for i in range(num_layers):                       # static unroll over layers
        d = 2 ** i                                    # static dilation
        w1 = w1_ref[i]
        w2 = w2_ref[i]
        b1 = b1_ref[i]
        b2 = b2_ref[i]

        a_full = slab_ref[...]                        # (hdr + M, Cp) f32
        a_cur = a_full[hdr:, :]                       # x[t]      (aligned view)
        a_prev = a_full[hdr - d:hdr - d + m_rows, :]  # x[t - d]  (header keeps it in-bounds)
        cur_bf = a_cur.astype(jnp.bfloat16)
        prev_bf = a_prev.astype(jnp.bfloat16)

        # conv1 -> chomp -> ReLU (dropout is identity in eval mode)
        h = mask * jnp.maximum(conv(prev_bf, cur_bf, w1, b1), 0.0)
        # TODO(synk): nn.Dropout is identity in eval mode; training-mode RNG
        # dropout (pltpu.prng_*) is not implemented here.

        # conv2 -> chomp -> ReLU; h's own causal history is zero thanks to the mask.
        h_prev = jnp.concatenate(
            [jnp.zeros((d, c_pad), jnp.float32), h[:m_rows - d, :]], axis=0)
        out = jnp.maximum(
            conv(h_prev.astype(jnp.bfloat16), h.astype(jnp.bfloat16), w2, b2), 0.0)

        # residual branch (1x1 conv only when n_inputs != n_outputs, i.e. layer 0)
        if i == 0 and has_downsample:
            res = (jnp.dot(cur_bf, wd_ref[...], preferred_element_type=jnp.float32)
                   + bd_ref[...])
        else:
            res = a_cur
        y = mask * jnp.maximum(out + res, 0.0)        # (M, Cp) f32

        if i < num_layers - 1:
            slab_ref[hdr:hdr + m_rows, :] = y         # in place; pad rows stay 0

    # Head: sigmoid(linear1(y1[:, :, -1])).  num_classes == 1, so instead of an
    # MXU matmul with 127 dead output columns, gather the Bb last real rows and
    # do a VPU multiply + lane reduction, then one lane-dense (Bb, 128) store.
    y3 = y.reshape(bb, t_tot, c_pad)
    y_last = y3[:, pad + seq_len - 1, :]              # (Bb, Cp) f32
    logits = jnp.sum(y_last * hw_ref[...], axis=-1, keepdims=True) + hb_ref[...]
    sig = jax.nn.sigmoid(logits)                      # (Bb, 1)
    o_ref[...] = jnp.broadcast_to(sig, o_ref.shape).astype(o_ref.dtype)
    # TODO(synk): num_classes > 1 (softmax) and wgan=True head variants are not
    # wired up; the default TCNDiscriminator path (num_classes=1, sigmoid) is.


# --------------------------------------------------------------------------
# Wrapper: layout plumbing + single pallas_call over a batch-tile grid.
# --------------------------------------------------------------------------
def _choose_batch_tile(batch, t_tot, c_pad, target_rows=256, max_slab_bytes=4 << 20):
    """How many batch elements to pack per grid step (sets the matmul M-dim)."""
    bb = max(1, target_rows // t_tot)
    bb = min(bb, max(1, max_slab_bytes // (t_tot * c_pad * 4)))
    if batch >= 2:
        bb = min(bb, (batch + 1) // 2)   # keep >= 2 grid steps for v7x's 2nd TC
    return max(1, min(bb, batch))


def tcn_discriminator_forward(x, cond_input, packed):
    """Mirrors TCNDiscriminator.forward((x, cond_input)) (num_classes=1, wgan=False)."""
    if cond_input is not None:
        x = jnp.concatenate([x, cond_input], axis=2)          # (B, L, F)
    B, L, F = x.shape
    num_layers = packed["w1"].shape[0]
    c_pad = packed["w1"].shape[2]
    has_ds = "wd" in packed

    max_dilation = 2 ** (num_layers - 1)
    pad = _round_up(max(8, max_dilation), 8)      # per-element causal zero rows
    assert pad >= max_dilation, "causal padding must cover the max dilation"
    hdr = pad                                     # global zero header for shifted views
    l_pad = _round_up(L, 8)
    t_tot = pad + l_pad

    bb = _choose_batch_tile(B, t_tot, c_pad)
    n_steps = -(-B // bb)
    b_pad = n_steps * bb
    o_lanes = 128                                 # lane-dense head output block

    # torch's x.transpose(1, 2) is absorbed into the (time, channel)-last layout.
    # Input slab is stored bf16 (it is cast to bf16 at the MXU anyway) to halve
    # the HBM->VMEM input DMA per grid step.
    x_slab = jnp.zeros((b_pad, t_tot, c_pad), jnp.bfloat16)
    x_slab = x_slab.at[:B, pad:pad + L, :F].set(x.astype(jnp.bfloat16))
    x_flat = x_slab.reshape(b_pad * t_tot, c_pad)

    # Hoisted per-tile row mask (re-zeroes pad / tail rows every layer).
    row = jnp.arange(t_tot)
    valid = ((row >= pad) & (row < pad + L)).astype(jnp.float32)
    mask = jnp.tile(valid, (bb,))[:, None]                     # (Bb*t_tot, 1)

    split_taps = _prefer_split_taps()
    kernel = functools.partial(
        fused_tcn_kernel, num_layers=num_layers, pad=pad, hdr=hdr, t_tot=t_tot,
        seq_len=L, split_taps=split_taps, has_downsample=has_ds)

    args = [x_flat, mask, packed["w1"], packed["b1"], packed["w2"], packed["b2"]]
    in_specs = [
        pl.BlockSpec((bb * t_tot, c_pad), lambda b: (b, 0)),
        pl.BlockSpec(mask.shape, lambda b: (0, 0)),
        pl.BlockSpec(packed["w1"].shape, lambda b: (0, 0, 0)),
        pl.BlockSpec(packed["b1"].shape, lambda b: (0, 0, 0)),
        pl.BlockSpec(packed["w2"].shape, lambda b: (0, 0, 0)),
        pl.BlockSpec(packed["b2"].shape, lambda b: (0, 0, 0)),
    ]
    if has_ds:
        args += [packed["wd"], packed["bd"]]
        in_specs += [pl.BlockSpec(packed["wd"].shape, lambda b: (0, 0)),
                     pl.BlockSpec(packed["bd"].shape, lambda b: (0, 0))]
    args += [packed["hw"], packed["hb"]]
    in_specs += [pl.BlockSpec(packed["hw"].shape, lambda b: (0, 0)),
                 pl.BlockSpec(packed["hb"].shape, lambda b: (0, 0))]

    # VMEM budget: scratch slab + double-buffered blocks + headroom, clamped to
    # stay well inside v7x's 64 MiB physical VMEM per TensorCore.
    slab_bytes = (hdr + bb * t_tot) * c_pad * 4
    weight_bytes = sum(int(a.size) * a.dtype.itemsize for a in packed.values())
    io_bytes = bb * t_tot * c_pad * 2 + int(mask.size) * 4 + bb * o_lanes * 4
    vmem_limit = int(min(48 << 20,
                         max(16 << 20,
                             2 * (weight_bytes + io_bytes) + slab_bytes + (2 << 20))))

    out = pl.pallas_call(
        kernel,
        out_shape=jax.ShapeDtypeStruct((n_steps, bb, o_lanes), jnp.float32),
        grid=(n_steps,),
        in_specs=in_specs,
        out_specs=pl.BlockSpec((None, bb, o_lanes), lambda b: (b, 0, 0)),
        scratch_shapes=[pltpu.VMEM((hdr + bb * t_tot, c_pad), jnp.float32)],
        compiler_params=pltpu.CompilerParams(
            dimension_semantics=("parallel",),
            vmem_limit_bytes=vmem_limit),
    )(*args)
    return out.reshape(b_pad, o_lanes)[:B, 0]   # sigmoid(linear1(y_last)).squeeze(1)


# --------------------------------------------------------------------------
# Parameters (PyTorch layout) + packing into the padded kernel layout.
# --------------------------------------------------------------------------
def make_raw_params(key, input_size, channels, num_layers, kernel_size, num_classes):
    """weight_norm (w = g * v / ||v||, dim=0) is parameter setup, applied here."""
    assert kernel_size == 2, "TCNDiscriminator default kernel_size=2 implemented"
    keys = jax.random.split(key, num_layers * 8 + 2)
    it = iter(keys)
    nk = lambda: next(it)

    def weight_norm(v, g):
        norm = jnp.sqrt(jnp.sum(v * v, axis=(1, 2), keepdims=True))
        return g[:, None, None] * v / norm

    layers = []
    for i in range(num_layers):
        cin = input_size if i == 0 else channels
        v1 = 0.01 * jax.random.normal(nk(), (channels, cin, kernel_size), jnp.float32)
        g1 = 1.0 + 0.1 * jax.random.normal(nk(), (channels,), jnp.float32)
        b1 = 0.05 * jax.random.normal(nk(), (channels,), jnp.float32)
        v2 = 0.01 * jax.random.normal(nk(), (channels, channels, kernel_size), jnp.float32)
        g2 = 1.0 + 0.1 * jax.random.normal(nk(), (channels,), jnp.float32)
        b2 = 0.05 * jax.random.normal(nk(), (channels,), jnp.float32)
        p = {"w1": weight_norm(v1, g1), "b1": b1,
             "w2": weight_norm(v2, g2), "b2": b2}
        if cin != channels:   # downsample 1x1 conv (plain Conv1d, no weight_norm)
            p["wd"] = 0.01 * jax.random.normal(nk(), (channels, cin, 1), jnp.float32)
            p["bd"] = 0.05 * jax.random.normal(nk(), (channels,), jnp.float32)
        layers.append(p)

    head_w = 0.01 * jax.random.normal(nk(), (num_classes, channels), jnp.float32)
    head_b = 0.05 * jax.random.normal(nk(), (num_classes,), jnp.float32)
    return layers, head_w, head_b


def pack_params(layers, head_w, head_b, *, input_size, channels, num_classes):
    assert num_classes == 1, "default TCNDiscriminator head (num_classes=1) implemented"
    num_layers = len(layers)
    c_pad = _round_up(max(input_size, channels), 128)

    w1 = jnp.zeros((num_layers, 2 * c_pad, c_pad), jnp.float32)
    w2 = jnp.zeros((num_layers, 2 * c_pad, c_pad), jnp.float32)
    b1 = jnp.zeros((num_layers, 1, c_pad), jnp.float32)
    b2 = jnp.zeros((num_layers, 1, c_pad), jnp.float32)
    for i, p in enumerate(layers):
        cin = p["w1"].shape[1]
        w1 = w1.at[i, :cin, :channels].set(p["w1"][:, :, 0].T)                 # tap x[t-d]
        w1 = w1.at[i, c_pad:c_pad + cin, :channels].set(p["w1"][:, :, 1].T)    # tap x[t]
        w2 = w2.at[i, :channels, :channels].set(p["w2"][:, :, 0].T)
        w2 = w2.at[i, c_pad:c_pad + channels, :channels].set(p["w2"][:, :, 1].T)
        b1 = b1.at[i, 0, :channels].set(p["b1"])
        b2 = b2.at[i, 0, :channels].set(p["b2"])

    packed = {"w1": w1.astype(jnp.bfloat16), "b1": b1,
              "w2": w2.astype(jnp.bfloat16), "b2": b2}

    if "wd" in layers[0]:
        wd = jnp.zeros((c_pad, c_pad), jnp.float32)
        wd = wd.at[:input_size, :channels].set(layers[0]["wd"][:, :, 0].T)
        bd = jnp.zeros((1, c_pad), jnp.float32)
        bd = bd.at[0, :channels].set(layers[0]["bd"])
        packed["wd"] = wd.astype(jnp.bfloat16)
        packed["bd"] = bd

    # Head weight as a single (1, c_pad) f32 row: the logit is a VPU multiply +
    # lane reduction in-kernel instead of a mostly-zero MXU matmul.
    hw = jnp.zeros((1, c_pad), jnp.float32)
    hw = hw.at[0, :channels].set(head_w[0, :])
    hb = jnp.array([[float(head_b[0])]], jnp.float32)
    packed["hw"] = hw
    packed["hb"] = hb
    return packed


# --------------------------------------------------------------------------
# Pure-JAX reference of TCNDiscriminator.forward for verification.
# emulate_bf16=True rounds every matmul operand to bf16 exactly like the kernel.
# --------------------------------------------------------------------------
def reference_forward(x, cond_input, layers, head_w, head_b, emulate_bf16=False):
    def rnd(a):
        return a.astype(jnp.bfloat16).astype(jnp.float32) if emulate_bf16 else a

    if cond_input is not None:
        x = jnp.concatenate([x, cond_input], axis=2)
    y = x
    L = y.shape[1]
    for i, p in enumerate(layers):
        d = 2 ** i

        def causal_conv(inp, w, b):
            ipad = jnp.pad(inp, ((0, 0), (d, 0), (0, 0)))
            return (jnp.einsum("blc,oc->blo", rnd(ipad[:, :L, :]), rnd(w[:, :, 0]))
                    + jnp.einsum("blc,oc->blo", rnd(ipad[:, d:, :]), rnd(w[:, :, 1])) + b)

        h = jax.nn.relu(causal_conv(y, p["w1"], p["b1"]))
        o = jax.nn.relu(causal_conv(h, p["w2"], p["b2"]))
        if "wd" in p:
            res = jnp.einsum("blc,oc->blo", rnd(y), rnd(p["wd"][:, :, 0])) + p["bd"]
        else:
            res = y
        y = jax.nn.relu(o + res)
    logits = y[:, -1, :] @ head_w.T + head_b
    return jax.nn.sigmoid(logits[:, 0])


if __name__ == "__main__":
    key = jax.random.PRNGKey(0)
    B, L = 2, 16
    x_feat, cond_feat = 3, 1
    input_size = x_feat + cond_feat
    channels, num_layers, kernel_size, num_classes = 32, 4, 2, 1

    k1, k2, k3 = jax.random.split(key, 3)
    x = jax.random.normal(k1, (B, L, x_feat), jnp.float32)
    cond = jax.random.normal(k2, (B, L, cond_feat), jnp.float32)

    layers, head_w, head_b = make_raw_params(
        k3, input_size, channels, num_layers, kernel_size, num_classes)
    packed = pack_params(layers, head_w, head_b, input_size=input_size,
                         channels=channels, num_classes=num_classes)

    out = tcn_discriminator_forward(x, cond, packed)
    out = jax.block_until_ready(out)
    assert out.shape == (B,), out.shape
    assert bool(jnp.all(jnp.isfinite(out)))

    # Tight check against a bf16-emulated reference (same rounding as the kernel)
    ref_bf16 = reference_forward(x, cond, layers, head_w, head_b, emulate_bf16=True)
    assert bool(jnp.allclose(out, ref_bf16, atol=5e-3)), (out, ref_bf16)
    # Loose check against the pure-f32 (PyTorch-semantics) reference
    ref_f32 = reference_forward(x, cond, layers, head_w, head_b)
    assert bool(jnp.allclose(out, ref_f32, atol=2e-2)), (out, ref_f32)
    print("KERNEL_OK")
</pallas_src>

<mosaic_0001>
module attributes {stable_mosaic.version = 11 : i64} {
  func.func @fused_tcn_kernel(%arg0: i32, %arg1: memref<24x128xbf16, #tpu.memory_space<vmem>>, %arg2: memref<24x1xf32, #tpu.memory_space<vmem>>, %arg3: memref<4x256x128xbf16, #tpu.memory_space<vmem>>, %arg4: memref<4x1x128xf32, #tpu.memory_space<vmem>>, %arg5: memref<4x256x128xbf16, #tpu.memory_space<vmem>>, %arg6: memref<4x1x128xf32, #tpu.memory_space<vmem>>, %arg7: memref<128x128xbf16, #tpu.memory_space<vmem>>, %arg8: memref<1x128xf32, #tpu.memory_space<vmem>>, %arg9: memref<1x128xf32, #tpu.memory_space<vmem>>, %arg10: memref<1x1xf32, #tpu.memory_space<vmem>>, %arg11: memref<1x1x128xf32, #tpu.memory_space<vmem>>, %arg12: memref<32x128xf32, #tpu.memory_space<vmem>>) attributes {dimension_semantics = [#tpu.dimension_semantics<parallel>], iteration_bounds = array<i64: 2>, scalar_prefetch = 0 : i64, scratch_operands = 1 : i64, tpu.core_type = #tpu.core_type<tc>, window_params = [{transform_indices = @transform_0, window_bounds = array<i64: 24, 128>}, {pipeline_mode = #tpu.pipeline_mode<synchronous>, transform_indices = @transform_1, window_bounds = array<i64: 24, 1>}, {pipeline_mode = #tpu.pipeline_mode<synchronous>, transform_indices = @transform_2, window_bounds = array<i64: 4, 256, 128>}, {pipeline_mode = #tpu.pipeline_mode<synchronous>, transform_indices = @transform_3, window_bounds = array<i64: 4, 1, 128>}, {pipeline_mode = #tpu.pipeline_mode<synchronous>, transform_indices = @transform_4, window_bounds = array<i64: 4, 256, 128>}, {pipeline_mode = #tpu.pipeline_mode<synchronous>, transform_indices = @transform_5, window_bounds = array<i64: 4, 1, 128>}, {pipeline_mode = #tpu.pipeline_mode<synchronous>, transform_indices = @transform_6, window_bounds = array<i64: 128, 128>}, {pipeline_mode = #tpu.pipeline_mode<synchronous>, transform_indices = @transform_7, window_bounds = array<i64: 1, 128>}, {pipeline_mode = #tpu.pipeline_mode<synchronous>, transform_indices = @transform_8, window_bounds = array<i64: 1, 128>}, {pipeline_mode = #tpu.pipeline_mode<synchronous>, transform_indices = @transform_9, window_bounds = array<i64: 1, 1>}, {transform_indices = @transform_10, window_bounds = array<i64: 1, 1, 128>}]} {
    %cst = arith.constant 0.000000e+00 : f32
    %0 = vector.broadcast %cst : f32 to vector<8x128xf32>
    %c0 = arith.constant 0 : index
    %c0_0 = arith.constant 0 : index
    %1 = vector.load %arg12[%c0, %c0_0] : memref<32x128xf32, #tpu.memory_space<vmem>>, vector<8x128xf32>
    tpu.vector_store %arg12[%c0, %c0_0], %0 {strides = array<i32>} : memref<32x128xf32, #tpu.memory_space<vmem>>, vector<8x128xf32>,
    %c0_1 = arith.constant 0 : index
    %c0_2 = arith.constant 0 : index
    %2 = vector.load %arg1[%c0_1, %c0_2] : memref<24x128xbf16, #tpu.memory_space<vmem>>, vector<24x128xbf16>
    %3 = arith.extf %2 : vector<24x128xbf16> to vector<24x128xf32>
    %c8 = arith.constant 8 : index
    %c0_3 = arith.constant 0 : index
    %4 = vector.load %arg12[%c8, %c0_3] : memref<32x128xf32, #tpu.memory_space<vmem>>, vector<24x128xf32>
    tpu.vector_store %arg12[%c8, %c0_3], %3 {strides = array<i32>} : memref<32x128xf32, #tpu.memory_space<vmem>>, vector<24x128xf32>,
    %c0_4 = arith.constant 0 : index
    %c0_5 = arith.constant 0 : index
    %5 = vector.load %arg2[%c0_4, %c0_5] : memref<24x1xf32, #tpu.memory_space<vmem>>, vector<24x1xf32>
    %c0_6 = arith.constant 0 : index
    %c0_7 = arith.constant 0 : index
    %c0_8 = arith.constant 0 : index
    %6 = vector.load %arg3[%c0_6, %c0_7, %c0_8] : memref<4x256x128xbf16, #tpu.memory_space<vmem>>, vector<1x256x128xbf16>
    %7 = vector.shape_cast %6 : vector<1x256x128xbf16> to vector<256x128xbf16>
    %c0_9 = arith.constant 0 : index
    %c0_10 = arith.constant 0 : index
    %c0_11 = arith.constant 0 : index
    %8 = vector.load %arg5[%c0_9, %c0_10, %c0_11] : memref<4x256x128xbf16, #tpu.memory_space<vmem>>, vector<1x256x128xbf16>
    %9 = vector.shape_cast %8 : vector<1x256x128xbf16> to vector<256x128xbf16>
    %c0_12 = arith.constant 0 : index
    %c0_13 = arith.constant 0 : index
    %c0_14 = arith.constant 0 : index
    %10 = vector.load %arg4[%c0_12, %c0_13, %c0_14] : memref<4x1x128xf32, #tpu.memory_space<vmem>>, vector<1x1x128xf32>
    %11 = vector.shape_cast %10 : vector<1x1x128xf32> to vector<1x128xf32>
    %c0_15 = arith.constant 0 : index
    %c0_16 = arith.constant 0 : index
    %c0_17 = arith.constant 0 : index
    %12 = vector.load %arg6[%c0_15, %c0_16, %c0_17] : memref<4x1x128xf32, #tpu.memory_space<vmem>>, vector<1x1x128xf32>
    %13 = vector.shape_cast %12 : vector<1x1x128xf32> to vector<1x128xf32>
    %c0_18 = arith.constant 0 : index
    %c0_19 = arith.constant 0 : index
    %14 = vector.load %arg12[%c0_18, %c0_19] : memref<32x128xf32, #tpu.memory_space<vmem>>, vector<32x128xf32>
    %15 = vector.extract_strided_slice %14 {offsets = [8, 0], sizes = [24, 128], strides = [1, 1]} : vector<32x128xf32> to vector<24x128xf32>
    %16 = vector.extract_strided_slice %14 {offsets = [7, 0], sizes = [24, 128], strides = [1, 1]} : vector<32x128xf32> to vector<24x128xf32>
    %17 = arith.truncf %15 : vector<24x128xf32> to vector<24x128xbf16>
    %18 = arith.truncf %16 : vector<24x128xf32> to vector<24x128xbf16>
    %19 = tpu.concatenate %18, %17 in 1 : vector<24x128xbf16>, vector<24x128xbf16> -> vector<24x256xbf16>
    %cst_20 = arith.constant dense<0.000000e+00> : vector<24x128xf32>
    %20 = tpu.matmul %19, %7, %cst_20 {dimension_numbers = #tpu.dot_dimension_numbers<[1], [0], [0], [1], [0, 0, 1, 1], [], []>} : vector<24x256xbf16>, vector<256x128xbf16>, vector<24x128xf32> -> vector<24x128xf32>
    %21 = vector.broadcast %11 : vector<1x128xf32> to vector<24x128xf32>
    %22 = arith.addf %20, %21 : vector<24x128xf32>
    %cst_21 = arith.constant 0.000000e+00 : f32
    %23 = vector.broadcast %cst_21 : f32 to vector<24x128xf32>
    %24 = arith.maximumf %22, %23 : vector<24x128xf32>
    %25 = vector.broadcast %5 : vector<24x1xf32> to vector<24x128xf32>
    %26 = arith.mulf %25, %24 : vector<24x128xf32>
    %cst_22 = arith.constant 0.000000e+00 : f32
    %27 = vector.broadcast %cst_22 : f32 to vector<1x128xf32>
    %28 = vector.extract_strided_slice %26 {offsets = [0, 0], sizes = [23, 128], strides = [1, 1]} : vector<24x128xf32> to vector<23x128xf32>
    %29 = tpu.concatenate %27, %28 in 0 : vector<1x128xf32>, vector<23x128xf32> -> vector<24x128xf32>
    %30 = arith.truncf %29 : vector<24x128xf32> to vector<24x128xbf16>
    %31 = arith.truncf %26 : vector<24x128xf32> to vector<24x128xbf16>
    %32 = tpu.concatenate %30, %31 in 1 : vector<24x128xbf16>, vector<24x128xbf16> -> vector<24x256xbf16>
    %cst_23 = arith.constant dense<0.000000e+00> : vector<24x128xf32>
    %33 = tpu.matmul %32, %9, %cst_23 {dimension_numbers = #tpu.dot_dimension_numbers<[1], [0], [0], [1], [0, 0, 1, 1], [], []>} : vector<24x256xbf16>, vector<256x128xbf16>, vector<24x128xf32> -> vector<24x128xf32>
    %34 = vector.broadcast %13 : vector<1x128xf32> to vector<24x128xf32>
    %35 = arith.addf %33, %34 : vector<24x128xf32>
    %cst_24 = arith.constant 0.000000e+00 : f32
    %36 = vector.broadcast %cst_24 : f32 to vector<24x128xf32>
    %37 = arith.maximumf %35, %36 : vector<24x128xf32>
    %c0_25 = arith.constant 0 : index
    %c0_26 = arith.constant 0 : index
    %38 = vector.load %arg7[%c0_25, %c0_26] : memref<128x128xbf16, #tpu.memory_space<vmem>>, vector<128x128xbf16>
    %cst_27 = arith.constant dense<0.000000e+00> : vector<24x128xf32>
    %39 = tpu.matmul %17, %38, %cst_27 {dimension_numbers = #tpu.dot_dimension_numbers<[1], [0], [0], [1], [0, 0, 1, 1], [], []>} : vector<24x128xbf16>, vector<128x128xbf16>, vector<24x128xf32> -> vector<24x128xf32>
    %c0_28 = arith.constant 0 : index
    %c0_29 = arith.constant 0 : index
    %40 = vector.load %arg8[%c0_28, %c0_29] : memref<1x128xf32, #tpu.memory_space<vmem>>, vector<1x128xf32>
    %41 = vector.broadcast %40 : vector<1x128xf32> to vector<24x128xf32>
    %42 = arith.addf %39, %41 : vector<24x128xf32>
    %43 = arith.addf %37, %42 : vector<24x128xf32>
    %cst_30 = arith.constant 0.000000e+00 : f32
    %44 = vector.broadcast %cst_30 : f32 to vector<24x128xf32>
    %45 = arith.maximumf %43, %44 : vector<24x128xf32>
    %46 = vector.broadcast %5 : vector<24x1xf32> to vector<24x128xf32>
    %47 = arith.mulf %46, %45 : vector<24x128xf32>
    %c8_31 = arith.constant 8 : index
    %c0_32 = arith.constant 0 : index
    %48 = vector.load %arg12[%c8_31, %c0_32] : memref<32x128xf32, #tpu.memory_space<vmem>>, vector<24x128xf32>
    tpu.vector_store %arg12[%c8_31, %c0_32], %47 {strides = array<i32>} : memref<32x128xf32, #tpu.memory_space<vmem>>, vector<24x128xf32>,
    %c1 = arith.constant 1 : index
    %c0_33 = arith.constant 0 : index
    %c0_34 = arith.constant 0 : index
    %49 = vector.load %arg3[%c1, %c0_33, %c0_34] : memref<4x256x128xbf16, #tpu.memory_space<vmem>>, vector<1x256x128xbf16>
    %50 = vector.shape_cast %49 : vector<1x256x128xbf16> to vector<256x128xbf16>
    %c1_35 = arith.constant 1 : index
    %c0_36 = arith.constant 0 : index
    %c0_37 = arith.constant 0 : index
    %51 = vector.load %arg5[%c1_35, %c0_36, %c0_37] : memref<4x256x128xbf16, #tpu.memory_space<vmem>>, vector<1x256x128xbf16>
    %52 = vector.shape_cast %51 : vector<1x256x128xbf16> to vector<256x128xbf16>
    %c1_38 = arith.constant 1 : index
    %c0_39 = arith.constant 0 : index
    %c0_40 = arith.constant 0 : index
    %53 = vector.load %arg4[%c1_38, %c0_39, %c0_40] : memref<4x1x128xf32, #tpu.memory_space<vmem>>, vector<1x1x128xf32>
    %54 = vector.shape_cast %53 : vector<1x1x128xf32> to vector<1x128xf32>
    %c1_41 = arith.constant 1 : index
    %c0_42 = arith.constant 0 : index
    %c0_43 = arith.constant 0 : index
    %55 = vector.load %arg6[%c1_41, %c0_42, %c0_43] : memref<4x1x128xf32, #tpu.memory_space<vmem>>, vector<1x1x128xf32>
    %56 = vector.shape_cast %55 : vector<1x1x128xf32> to vector<1x128xf32>
    %c0_44 = arith.constant 0 : index
    %c0_45 = arith.constant 0 : index
    %57 = vector.load %arg12[%c0_44, %c0_45] : memref<32x128xf32, #tpu.memory_space<vmem>>, vector<32x128xf32>
    %58 = vector.extract_strided_slice %57 {offsets = [8, 0], sizes = [24, 128], strides = [1, 1]} : vector<32x128xf32> to vector<24x128xf32>
    %59 = vector.extract_strided_slice %57 {offsets = [6, 0], sizes = [24, 128], strides = [1, 1]} : vector<32x128xf32> to vector<24x128xf32>
    %60 = arith.truncf %58 : vector<24x128xf32> to vector<24x128xbf16>
    %61 = arith.truncf %59 : vector<24x128xf32> to vector<24x128xbf16>
    %62 = tpu.concatenate %61, %60 in 1 : vector<24x128xbf16>, vector<24x128xbf16> -> vector<24x256xbf16>
    %cst_46 = arith.constant dense<0.000000e+00> : vector<24x128xf32>
    %63 = tpu.matmul %62, %50, %cst_46 {dimension_numbers = #tpu.dot_dimension_numbers<[1], [0], [0], [1], [0, 0, 1, 1], [], []>} : vector<24x256xbf16>, vector<256x128xbf16>, vector<24x128xf32> -> vector<24x128xf32>
    %64 = vector.broadcast %54 : vector<1x128xf32> to vector<24x128xf32>
    %65 = arith.addf %63, %64 : vector<24x128xf32>
    %cst_47 = arith.constant 0.000000e+00 : f32
    %66 = vector.broadcast %cst_47 : f32 to vector<24x128xf32>
    %67 = arith.maximumf %65, %66 : vector<24x128xf32>
    %68 = vector.broadcast %5 : vector<24x1xf32> to vector<24x128xf32>
    %69 = arith.mulf %68, %67 : vector<24x128xf32>
    %cst_48 = arith.constant 0.000000e+00 : f32
    %70 = vector.broadcast %cst_48 : f32 to vector<2x128xf32>
    %71 = vector.extract_strided_slice %69 {offsets = [0, 0], sizes = [22, 128], strides = [1, 1]} : vector<24x128xf32> to vector<22x128xf32>
    %72 = tpu.concatenate %70, %71 in 0 : vector<2x128xf32>, vector<22x128xf32> -> vector<24x128xf32>
    %73 = arith.truncf %72 : vector<24x128xf32> to vector<24x128xbf16>
    %74 = arith.truncf %69 : vector<24x128xf32> to vector<24x128xbf16>
    %75 = tpu.concatenate %73, %74 in 1 : vector<24x128xbf16>, vector<24x128xbf16> -> vector<24x256xbf16>
    %cst_49 = arith.constant dense<0.000000e+00> : vector<24x128xf32>
    %76 = tpu.matmul %75, %52, %cst_49 {dimension_numbers = #tpu.dot_dimension_numbers<[1], [0], [0], [1], [0, 0, 1, 1], [], []>} : vector<24x256xbf16>, vector<256x128xbf16>, vector<24x128xf32> -> vector<24x128xf32>
    %77 = vector.broadcast %56 : vector<1x128xf32> to vector<24x128xf32>
    %78 = arith.addf %76, %77 : vector<24x128xf32>
    %cst_50 = arith.constant 0.000000e+00 : f32
    %79 = vector.broadcast %cst_50 : f32 to vector<24x128xf32>
    %80 = arith.maximumf %78, %79 : vector<24x128xf32>
    %81 = arith.addf %80, %58 : vector<24x128xf32>
    %cst_51 = arith.constant 0.000000e+00 : f32
    %82 = vector.broadcast %cst_51 : f32 to vector<24x128xf32>
    %83 = arith.maximumf %81, %82 : vector<24x128xf32>
    %84 = vector.broadcast %5 : vector<24x1xf32> to vector<24x128xf32>
    %85 = arith.mulf %84, %83 : vector<24x128xf32>
    %c8_52 = arith.constant 8 : index
    %c0_53 = arith.constant 0 : index
    %86 = vector.load %arg12[%c8_52, %c0_53] : memref<32x128xf32, #tpu.memory_space<vmem>>, vector<24x128xf32>
    tpu.vector_store %arg12[%c8_52, %c0_53], %85 {strides = array<i32>} : memref<32x128xf32, #tpu.memory_space<vmem>>, vector<24x128xf32>,
    %c2 = arith.constant 2 : index
    %c0_54 = arith.constant 0 : index
    %c0_55 = arith.constant 0 : index
    %87 = vector.load %arg3[%c2, %c0_54, %c0_55] : memref<4x256x128xbf16, #tpu.memory_space<vmem>>, vector<1x256x128xbf16>
    %88 = vector.shape_cast %87 : vector<1x256x128xbf16> to vector<256x128xbf16>
    %c2_56 = arith.constant 2 : index
    %c0_57 = arith.constant 0 : index
    %c0_58 = arith.constant 0 : index
    %89 = vector.load %arg5[%c2_56, %c0_57, %c0_58] : memref<4x256x128xbf16, #tpu.memory_space<vmem>>, vector<1x256x128xbf16>
    %90 = vector.shape_cast %89 : vector<1x256x128xbf16> to vector<256x128xbf16>
    %c2_59 = arith.constant 2 : index
    %c0_60 = arith.constant 0 : index
    %c0_61 = arith.constant 0 : index
    %91 = vector.load %arg4[%c2_59, %c0_60, %c0_61] : memref<4x1x128xf32, #tpu.memory_space<vmem>>, vector<1x1x128xf32>
    %92 = vector.shape_cast %91 : vector<1x1x128xf32> to vector<1x128xf32>
    %c2_62 = arith.constant 2 : index
    %c0_63 = arith.constant 0 : index
    %c0_64 = arith.constant 0 : index
    %93 = vector.load %arg6[%c2_62, %c0_63, %c0_64] : memref<4x1x128xf32, #tpu.memory_space<vmem>>, vector<1x1x128xf32>
    %94 = vector.shape_cast %93 : vector<1x1x128xf32> to vector<1x128xf32>
    %c0_65 = arith.constant 0 : index
    %c0_66 = arith.constant 0 : index
    %95 = vector.load %arg12[%c0_65, %c0_66] : memref<32x128xf32, #tpu.memory_space<vmem>>, vector<32x128xf32>
    %96 = vector.extract_strided_slice %95 {offsets = [8, 0], sizes = [24, 128], strides = [1, 1]} : vector<32x128xf32> to vector<24x128xf32>
    %97 = vector.extract_strided_slice %95 {offsets = [4, 0], sizes = [24, 128], strides = [1, 1]} : vector<32x128xf32> to vector<24x128xf32>
    %98 = arith.truncf %96 : vector<24x128xf32> to vector<24x128xbf16>
    %99 = arith.truncf %97 : vector<24x128xf32> to vector<24x128xbf16>
    %100 = tpu.concatenate %99, %98 in 1 : vector<24x128xbf16>, vector<24x128xbf16> -> vector<24x256xbf16>
    %cst_67 = arith.constant dense<0.000000e+00> : vector<24x128xf32>
    %101 = tpu.matmul %100, %88, %cst_67 {dimension_numbers = #tpu.dot_dimension_numbers<[1], [0], [0], [1], [0, 0, 1, 1], [], []>} : vector<24x256xbf16>, vector<256x128xbf16>, vector<24x128xf32> -> vector<24x128xf32>
    %102 = vector.broadcast %92 : vector<1x128xf32> to vector<24x128xf32>
    %103 = arith.addf %101, %102 : vector<24x128xf32>
    %cst_68 = arith.constant 0.000000e+00 : f32
    %104 = vector.broadcast %cst_68 : f32 to vector<24x128xf32>
    %105 = arith.maximumf %103, %104 : vector<24x128xf32>
    %106 = vector.broadcast %5 : vector<24x1xf32> to vector<24x128xf32>
    %107 = arith.mulf %106, %105 : vector<24x128xf32>
    %cst_69 = arith.constant 0.000000e+00 : f32
    %108 = vector.broadcast %cst_69 : f32 to vector<4x128xf32>
    %109 = vector.extract_strided_slice %107 {offsets = [0, 0], sizes = [20, 128], strides = [1, 1]} : vector<24x128xf32> to vector<20x128xf32>
    %110 = tpu.concatenate %108, %109 in 0 : vector<4x128xf32>, vector<20x128xf32> -> vector<24x128xf32>
    %111 = arith.truncf %110 : vector<24x128xf32> to vector<24x128xbf16>
    %112 = arith.truncf %107 : vector<24x128xf32> to vector<24x128xbf16>
    %113 = tpu.concatenate %111, %112 in 1 : vector<24x128xbf16>, vector<24x128xbf16> -> vector<24x256xbf16>
    %cst_70 = arith.constant dense<0.000000e+00> : vector<24x128xf32>
    %114 = tpu.matmul %113, %90, %cst_70 {dimension_numbers = #tpu.dot_dimension_numbers<[1], [0], [0], [1], [0, 0, 1, 1], [], []>} : vector<24x256xbf16>, vector<256x128xbf16>, vector<24x128xf32> -> vector<24x128xf32>
    %115 = vector.broadcast %94 : vector<1x128xf32> to vector<24x128xf32>
    %116 = arith.addf %114, %115 : vector<24x128xf32>
    %cst_71 = arith.constant 0.000000e+00 : f32
    %117 = vector.broadcast %cst_71 : f32 to vector<24x128xf32>
    %118 = arith.maximumf %116, %117 : vector<24x128xf32>
    %119 = arith.addf %118, %96 : vector<24x128xf32>
    %cst_72 = arith.constant 0.000000e+00 : f32
    %120 = vector.broadcast %cst_72 : f32 to vector<24x128xf32>
    %121 = arith.maximumf %119, %120 : vector<24x128xf32>
    %122 = vector.broadcast %5 : vector<24x1xf32> to vector<24x128xf32>
    %123 = arith.mulf %122, %121 : vector<24x128xf32>
    %c8_73 = arith.constant 8 : index
    %c0_74 = arith.constant 0 : index
    %124 = vector.load %arg12[%c8_73, %c0_74] : memref<32x128xf32, #tpu.memory_space<vmem>>, vector<24x128xf32>
    tpu.vector_store %arg12[%c8_73, %c0_74], %123 {strides = array<i32>} : memref<32x128xf32, #tpu.memory_space<vmem>>, vector<24x128xf32>,
    %c3 = arith.constant 3 : index
    %c0_75 = arith.constant 0 : index
    %c0_76 = arith.constant 0 : index
    %125 = vector.load %arg3[%c3, %c0_75, %c0_76] : memref<4x256x128xbf16, #tpu.memory_space<vmem>>, vector<1x256x128xbf16>
    %126 = vector.shape_cast %125 : vector<1x256x128xbf16> to vector<256x128xbf16>
    %c3_77 = arith.constant 3 : index
    %c0_78 = arith.constant 0 : index
    %c0_79 = arith.constant 0 : index
    %127 = vector.load %arg5[%c3_77, %c0_78, %c0_79] : memref<4x256x128xbf16, #tpu.memory_space<vmem>>, vector<1x256x128xbf16>
    %128 = vector.shape_cast %127 : vector<1x256x128xbf16> to vector<256x128xbf16>
    %c3_80 = arith.constant 3 : index
    %c0_81 = arith.constant 0 : index
    %c0_82 = arith.constant 0 : index
    %129 = vector.load %arg4[%c3_80, %c0_81, %c0_82] : memref<4x1x128xf32, #tpu.memory_space<vmem>>, vector<1x1x128xf32>
    %130 = vector.shape_cast %129 : vector<1x1x128xf32> to vector<1x128xf32>
    %c3_83 = arith.constant 3 : index
    %c0_84 = arith.constant 0 : index
    %c0_85 = arith.constant 0 : index
    %131 = vector.load %arg6[%c3_83, %c0_84, %c0_85] : memref<4x1x128xf32, #tpu.memory_space<vmem>>, vector<1x1x128xf32>
    %132 = vector.shape_cast %131 : vector<1x1x128xf32> to vector<1x128xf32>
    %c0_86 = arith.constant 0 : index
    %c0_87 = arith.constant 0 : index
    %133 = vector.load %arg12[%c0_86, %c0_87] : memref<32x128xf32, #tpu.memory_space<vmem>>, vector<32x128xf32>
    %134 = vector.extract_strided_slice %133 {offsets = [8, 0], sizes = [24, 128], strides = [1, 1]} : vector<32x128xf32> to vector<24x128xf32>
    %135 = vector.extract_strided_slice %133 {offsets = [0, 0], sizes = [24, 128], strides = [1, 1]} : vector<32x128xf32> to vector<24x128xf32>
    %136 = arith.truncf %134 : vector<24x128xf32> to vector<24x128xbf16>
    %137 = arith.truncf %135 : vector<24x128xf32> to vector<24x128xbf16>
    %138 = tpu.concatenate %137, %136 in 1 : vector<24x128xbf16>, vector<24x128xbf16> -> vector<24x256xbf16>
    %cst_88 = arith.constant dense<0.000000e+00> : vector<24x128xf32>
    %139 = tpu.matmul %138, %126, %cst_88 {dimension_numbers = #tpu.dot_dimension_numbers<[1], [0], [0], [1], [0, 0, 1, 1], [], []>} : vector<24x256xbf16>, vector<256x128xbf16>, vector<24x128xf32> -> vector<24x128xf32>
    %140 = vector.broadcast %130 : vector<1x128xf32> to vector<24x128xf32>
    %141 = arith.addf %139, %140 : vector<24x128xf32>
    %cst_89 = arith.constant 0.000000e+00 : f32
    %142 = vector.broadcast %cst_89 : f32 to vector<24x128xf32>
    %143 = arith.maximumf %141, %142 : vector<24x128xf32>
    %144 = vector.broadcast %5 : vector<24x1xf32> to vector<24x128xf32>
    %145 = arith.mulf %144, %143 : vector<24x128xf32>
    %cst_90 = arith.constant 0.000000e+00 : f32
    %146 = vector.broadcast %cst_90 : f32 to vector<8x128xf32>
    %147 = vector.extract_strided_slice %145 {offsets = [0, 0], sizes = [16, 128], strides = [1, 1]} : vector<24x128xf32> to vector<16x128xf32>
    %148 = tpu.concatenate %146, %147 in 0 : vector<8x128xf32>, vector<16x128xf32> -> vector<24x128xf32>
    %149 = arith.truncf %148 : vector<24x128xf32> to vector<24x128xbf16>
    %150 = arith.truncf %145 : vector<24x128xf32> to vector<24x128xbf16>
    %151 = tpu.concatenate %149, %150 in 1 : vector<24x128xbf16>, vector<24x128xbf16> -> vector<24x256xbf16>
    %cst_91 = arith.constant dense<0.000000e+00> : vector<24x128xf32>
    %152 = tpu.matmul %151, %128, %cst_91 {dimension_numbers = #tpu.dot_dimension_numbers<[1], [0], [0], [1], [0, 0, 1, 1], [], []>} : vector<24x256xbf16>, vector<256x128xbf16>, vector<24x128xf32> -> vector<24x128xf32>
    %153 = vector.broadcast %132 : vector<1x128xf32> to vector<24x128xf32>
    %154 = arith.addf %152, %153 : vector<24x128xf32>
    %cst_92 = arith.constant 0.000000e+00 : f32
    %155 = vector.broadcast %cst_92 : f32 to vector<24x128xf32>
    %156 = arith.maximumf %154, %155 : vector<24x128xf32>
    %157 = arith.addf %156, %134 : vector<24x128xf32>
    %cst_93 = arith.constant 0.000000e+00 : f32
    %158 = vector.broadcast %cst_93 : f32 to vector<24x128xf32>
    %159 = arith.maximumf %157, %158 : vector<24x128xf32>
    %160 = vector.broadcast %5 : vector<24x1xf32> to vector<24x128xf32>
    %161 = arith.mulf %160, %159 : vector<24x128xf32>
    %162 = vector.shape_cast %161 : vector<24x128xf32> to vector<1x24x128xf32>
    %163 = vector.extract_strided_slice %162 {offsets = [0, 23, 0], sizes = [1, 1, 128], strides = [1, 1, 1]} : vector<1x24x128xf32> to vector<1x1x128xf32>
    %164 = vector.shape_cast %163 : vector<1x1x128xf32> to vector<1x128xf32>
    %c0_94 = arith.constant 0 : index
    %c0_95 = arith.constant 0 : index
    %165 = vector.load %arg9[%c0_94, %c0_95] : memref<1x128xf32, #tpu.memory_space<vmem>>, vector<1x128xf32>
    %166 = arith.mulf %164, %165 : vector<1x128xf32>
    %cst_96 = arith.constant dense<0.000000e+00> : vector<1xf32>
    %167 = vector.multi_reduction <add>, %166, %cst_96 [1] : vector<1x128xf32> to vector<1xf32>
    %168 = vector.shape_cast %167 : vector<1xf32> to vector<1x1xf32>
    %c0_97 = arith.constant 0 : index
    %c0_98 = arith.constant 0 : index
    %169 = vector.load %arg10[%c0_97, %c0_98] : memref<1x1xf32, #tpu.memory_space<vmem>>, vector<1x1xf32>
    %170 = arith.addf %168, %169 : vector<1x1xf32>
    %171 = arith.negf %170 : vector<1x1xf32>
    %172 = math.exp %171 : vector<1x1xf32>
    %cst_99 = arith.constant 1.000000e+00 : f32
    %173 = vector.broadcast %cst_99 : f32 to vector<1x1xf32>
    %174 = arith.addf %173, %172 : vector<1x1xf32>
    %175 = arith.divf %173, %174 : vector<1x1xf32>
    %176 = vector.shape_cast %175 : vector<1x1xf32> to vector<1x1xf32>
    %177 = vector.broadcast %176 : vector<1x1xf32> to vector<1x128xf32>
    %c0_100 = arith.constant 0 : index
    %c0_101 = arith.constant 0 : index
    %c0_102 = arith.constant 0 : index
    %178 = vector.load %arg11[%c0_100, %c0_101, %c0_102] : memref<1x1x128xf32, #tpu.memory_space<vmem>>, vector<1x1x128xf32>
    %179 = vector.shape_cast %178 : vector<1x1x128xf32> to vector<1x128xf32>
    %180 = vector.shape_cast %177 : vector<1x128xf32> to vector<1x1x128xf32>
    tpu.vector_store %arg11[%c0_100, %c0_101, %c0_102], %180 {strides = array<i32>} : memref<1x1x128xf32, #tpu.memory_space<vmem>>, vector<1x1x128xf32>,
    return
  }
  func.func @transform_0(%arg0: i32) -> (i32, i32) {
    %c0_i32 = arith.constant 0 : i32
    %c0_i32_0 = arith.constant 0 : i32
    return %arg0, %c0_i32 : i32, i32
  }
  func.func @transform_1(%arg0: i32) -> (i32, i32) {
    %c0_i32 = arith.constant 0 : i32
    %c0_i32_0 = arith.constant 0 : i32
    %c0_i32_1 = arith.constant 0 : i32
    return %c0_i32, %c0_i32_0 : i32, i32
  }
  func.func @transform_2(%arg0: i32) -> (i32, i32, i32) {
    %c0_i32 = arith.constant 0 : i32
    %c0_i32_0 = arith.constant 0 : i32
    %c0_i32_1 = arith.constant 0 : i32
    %c0_i32_2 = arith.constant 0 : i32
    return %c0_i32, %c0_i32_0, %c0_i32_1 : i32, i32, i32
  }
  func.func @transform_3(%arg0: i32) -> (i32, i32, i32) {
    %c0_i32 = arith.constant 0 : i32
    %c0_i32_0 = arith.constant 0 : i32
    %c0_i32_1 = arith.constant 0 : i32
    %c0_i32_2 = arith.constant 0 : i32
    return %c0_i32, %c0_i32_0, %c0_i32_1 : i32, i32, i32
  }
  func.func @transform_4(%arg0: i32) -> (i32, i32, i32) {
    %c0_i32 = arith.constant 0 : i32
    %c0_i32_0 = arith.constant 0 : i32
    %c0_i32_1 = arith.constant 0 : i32
    %c0_i32_2 = arith.constant 0 : i32
    return %c0_i32, %c0_i32_0, %c0_i32_1 : i32, i32, i32
  }
  func.func @transform_5(%arg0: i32) -> (i32, i32, i32) {
    %c0_i32 = arith.constant 0 : i32
    %c0_i32_0 = arith.constant 0 : i32
    %c0_i32_1 = arith.constant 0 : i32
    %c0_i32_2 = arith.constant 0 : i32
    return %c0_i32, %c0_i32_0, %c0_i32_1 : i32, i32, i32
  }
  func.func @transform_6(%arg0: i32) -> (i32, i32) {
    %c0_i32 = arith.constant 0 : i32
    %c0_i32_0 = arith.constant 0 : i32
    %c0_i32_1 = arith.constant 0 : i32
    return %c0_i32, %c0_i32_0 : i32, i32
  }
  func.func @transform_7(%arg0: i32) -> (i32, i32) {
    %c0_i32 = arith.constant 0 : i32
    %c0_i32_0 = arith.constant 0 : i32
    %c0_i32_1 = arith.constant 0 : i32
    return %c0_i32, %c0_i32_0 : i32, i32
  }
  func.func @transform_8(%arg0: i32) -> (i32, i32) {
    %c0_i32 = arith.constant 0 : i32
    %c0_i32_0 = arith.constant 0 : i32
    %c0_i32_1 = arith.constant 0 : i32
    return %c0_i32, %c0_i32_0 : i32, i32
  }
  func.func @transform_9(%arg0: i32) -> (i32, i32) {
    %c0_i32 = arith.constant 0 : i32
    %c0_i32_0 = arith.constant 0 : i32
    %c0_i32_1 = arith.constant 0 : i32
    return %c0_i32, %c0_i32_0 : i32, i32
  }
  func.func @transform_10(%arg0: i32) -> (i32, i32, i32) {
    %c0_i32 = arith.constant 0 : i32
    %c0_i32_0 = arith.constant 0 : i32
    %c0_i32_1 = arith.constant 0 : i32
    return %arg0, %c0_i32, %c0_i32_0 : i32, i32, i32
  }
}

</mosaic_0001>

<llo_original>
// kernel: tpu_custom_call.1
$region0: #{tpu_custom_call.1}
  #allocation0 [shape = 'u32[]', space=smem, size = 0x4, offset = 0x4, fixed_abs, tag = 'smem constant byte address 0x4 - core index']
  #allocation1 [shape = 'u32[144,128]{1,0:T(1,128)}', space=vmem, size = 0x12000, scoped, tag = 'internal scratch']
  #allocation2 [shape = 'f32[32,128]{1,0:T(8,128)}', space=vmem, size = 0x4000, scoped, tag = 'scratch operand']
  #allocation3 [shape = 'f32[1,1]{1,0:T(1,128)S(1)}', space=vmem, size = 0x200, scoped, tag = 'scoped memory for tpu_custom_call.1']
  %s0 = inlined_call_operand.vmem [shape: bf16[48,128], index: 0, kind: input, shape index: {}]
  %s1 = inlined_call_operand.vmem [shape: f32[24,1], index: 1, kind: input, shape index: {}]
  %s2 = inlined_call_operand.hbm [shape: bf16[4,256,128], index: 2, kind: input, shape index: {}]
  %s3 = inlined_call_operand.vmem [shape: f32[4,1,128], index: 3, kind: input, shape index: {}]
  %s4 = inlined_call_operand.hbm [shape: bf16[4,256,128], index: 4, kind: input, shape index: {}]
  %s5 = inlined_call_operand.vmem [shape: f32[4,1,128], index: 5, kind: input, shape index: {}]
  %s6 = inlined_call_operand.hbm [shape: bf16[128,128], index: 6, kind: input, shape index: {}]
  %s7 = inlined_call_operand.vmem [shape: f32[1,128], index: 7, kind: input, shape index: {}]
  %s8 = inlined_call_operand.vmem [shape: f32[1,128], index: 8, kind: input, shape index: {}]
  %s9 = inlined_call_operand.<no memory space> [shape: f32[1,1], index: 9, kind: input, shape index: {}]
  %s10 = inlined_call_operand.hbm [shape: f32[2,1,128], index: 10, kind: output, shape index: {}]
  %s11 = sld [smem:[#allocation0]]
  $region85: #{tpu_custom_call.1} parent=0
    _
  %s13 = ssub.s32 1, %s11
  %s14 = scalar_select 0, %s13, %s11
  %v15 = vstv %s9
  %16 = vst [vmem:[#allocation3] sm:$0x1] %v15
  $region1: #{tpu_custom_call.1} parent=0
    #allocation4 [shape = 'u8[262144]{0}', space=vmem, size = 0x40000, scoped, tag = 'input window, operand 2, single buffered']
    #allocation5 [shape = 's32[2]{0}', space=sflag, size = 0x8, scoped, tag = 'scoped memory for tpu_custom_call.1']
    #allocation6 [shape = 's32[2]{0}', space=sflag, size = 0x8, scoped, tag = 'scoped memory for tpu_custom_call.1']
    #allocation7 [shape = 'u8[262144]{0}', space=vmem, size = 0x40000, scoped, tag = 'input window, operand 4, single buffered']
    #allocation8 [shape = 's32[1]{0}', space=sflag, size = 0x4, scoped, tag = 'scoped memory for tpu_custom_call.1']
    #allocation9 [shape = 'u8[32768]{0}', space=vmem, size = 0x8000, scoped, tag = 'input window, operand 6, single buffered']
    #allocation10 [shape = 'u8[1024]{0}', space=vmem, size = 0x400, scoped, tag = 'output window, operand 0']
    %17 = vsyncpa [#allocation5], 0
    %18 = vsyncpa [#allocation8], 0
    %19 = vsyncpa [#allocation6], 0
    %s20 = scalar_lea.sflag [#allocation6], 1
    %21 = vsyncpa %s20, 0
    loop: start=0, step=1, limit=4
    $region2: #{tpu_custom_call.1} parent=1 // loop_pre_header
      _
    $region3: #{tpu_custom_call.1} parent=1 // loop_header
      %s23 = sphi 0, %s27
      %p24 = scmp.ge.s32.totalorder %s23, 4
      %s33 = sphi 0, %s35
      %s36 = sphi 0, %s33
      %s37 = sphi 0, %s36
      %s53 = sphi 0, %s37
      %s57 = sphi 0, %s57
      %s59 = sphi 0, %s57
      %s60 = sphi 0, %s59
      %s74 = sphi 0, %s60
      %s78 = sphi 0, %s78
      %s80 = sphi 0, %s78
      %s81 = sphi 0, %s80
      %s95 = sphi 0, %s81
      %s99 = sphi 0, %s99
      %s101 = sphi 0, %s99
      %s102 = sphi 0, %s101
      %s116 = sphi 0, %s102
      %s120 = sphi 0, %s120
      %s122 = sphi 0, %s120
      %s123 = sphi 0, %s122
      %s137 = sphi 0, %s123
      %s141 = sphi 0, %s141
      %s143 = sphi 0, %s141
      %s144 = sphi 0, %s143
      %s158 = sphi 0, %s144
      %s162 = sphi 0, %s162
      %s164 = sphi 0, %s162
      %s165 = sphi 0, %s164
      %s179 = sphi 0, %s165
      %s183 = sphi 0, %s183
      %s185 = sphi 0, %s183
      %s186 = sphi 0, %s185
      %s200 = sphi 0, %s186
      %s204 = sphi 0, %s204
      %s206 = sphi 0, %s204
      %s207 = sphi 0, %s206
      %s221 = sphi 0, %s207
      %s225 = sphi 0, %s225
      %s227 = sphi 0, %s225
      %s228 = sphi 0, %s227
      %s242 = sphi 0, %s228
      %s248 = sphi 0, %s250
      %s251 = sphi 0, %s248
      %s252 = sphi 0, %s251
      %s268 = sphi 0, %s252
    $region4: #{tpu_custom_call.1} parent=1 // loop_header_branch
      %26 = sbr.rel (%p24) target = $region8
    $region5: #{tpu_custom_call.1} parent=1 // loop_body
      %s28 = ssub.s32 %s23, 1
      %s29 = ssub.s32 %s23, 2
      %s30 = sadd.s32 %s23, 1
      %s31 = ssub.s32 %s23, %s30
      %p32 = scmp.eq.s32.totalorder %s31, 0
      %s34 = sadd.s32 %s33, 1
      %s35 = scalar_select %p32, %s33, %s34
      %p38 = pneg %p32
      %p39 = scmp.eq.s32.totalorder %s23, 1
      %p40 = por %p38, %p39
      %p41 = scmp.ne.s32.totalorder %s33, %s36
      %p42 = scmp.eq.s32.totalorder %s23, 0
      %p43 = por %p41, %p42
      %p44 = scmp.ne.s32.totalorder %s33, %s36
      %p45 = scmp.eq.s32.totalorder %s28, 1
      %p46 = por %p44, %p45
      %p47 = scmp.ne.s32.totalorder %s36, %s37
      %p48 = scmp.eq.s32.totalorder %s28, 0
      %p49 = por %p47, %p48
      %p50 = scmp.ne.s32.totalorder %s36, %s37
      %p51 = scmp.eq.s32.totalorder %s29, 1
      %p52 = por %p50, %p51
      %p54 = scmp.ne.s32.totalorder %s37, %s53
      %p55 = scmp.eq.s32.totalorder %s29, 0
      %p56 = por %p54, %p55
      %s58 = sadd.s32 %s57, 1
      %p61 = scmp.eq.s32.totalorder %s23, 1
      %p62 = scmp.ne.s32.totalorder %s57, %s59
      %p63 = scmp.eq.s32.totalorder %s23, 0
      %p64 = por %p62, %p63
      %p65 = scmp.ne.s32.totalorder %s57, %s59
      %p66 = scmp.eq.s32.totalorder %s28, 1
      %p67 = por %p65, %p66
      %p68 = scmp.ne.s32.totalorder %s59, %s60
      %p69 = scmp.eq.s32.totalorder %s28, 0
      %p70 = por %p68, %p69
      %p71 = scmp.ne.s32.totalorder %s59, %s60
      %p72 = scmp.eq.s32.totalorder %s29, 1
      %p73 = por %p71, %p72
      %p75 = scmp.ne.s32.totalorder %s60, %s74
      %p76 = scmp.eq.s32.totalorder %s29, 0
      %p77 = por %p75, %p76
      %s79 = sadd.s32 %s78, 1
      %p82 = scmp.eq.s32.totalorder %s23, 1
      %p83 = scmp.ne.s32.totalorder %s78, %s80
      %p84 = scmp.eq.s32.totalorder %s23, 0
      %p85 = por %p83, %p84
      %p86 = scmp.ne.s32.totalorder %s78, %s80
      %p87 = scmp.eq.s32.totalorder %s28, 1
      %p88 = por %p86, %p87
      %p89 = scmp.ne.s32.totalorder %s80, %s81
      %p90 = scmp.eq.s32.totalorder %s28, 0
      %p91 = por %p89, %p90
      %p92 = scmp.ne.s32.totalorder %s80, %s81
      %p93 = scmp.eq.s32.totalorder %s29, 1
      %p94 = por %p92, %p93
      %p96 = scmp.ne.s32.totalorder %s81, %s95
      %p97 = scmp.eq.s32.totalorder %s29, 0
      %p98 = por %p96, %p97
      %s100 = sadd.s32 %s99, 1
      %p103 = scmp.eq.s32.totalorder %s23, 1
      %p104 = scmp.ne.s32.totalorder %s99, %s101
      %p105 = scmp.eq.s32.totalorder %s23, 0
      %p106 = por %p104, %p105
      %p107 = scmp.ne.s32.totalorder %s99, %s101
      %p108 = scmp.eq.s32.totalorder %s28, 1
      %p109 = por %p107, %p108
      %p110 = scmp.ne.s32.totalorder %s101, %s102
      %p111 = scmp.eq.s32.totalorder %s28, 0
      %p112 = por %p110, %p111
      %p113 = scmp.ne.s32.totalorder %s101, %s102
      %p114 = scmp.eq.s32.totalorder %s29, 1
      %p115 = por %p113, %p114
      %p117 = scmp.ne.s32.totalorder %s102, %s116
      %p118 = scmp.eq.s32.totalorder %s29, 0
      %p119 = por %p117, %p118
      %s121 = sadd.s32 %s120, 1
      %p124 = scmp.eq.s32.totalorder %s23, 1
      %p125 = scmp.ne.s32.totalorder %s120, %s122
      %p126 = scmp.eq.s32.totalorder %s23, 0
      %p127 = por %p125, %p126
      %p128 = scmp.ne.s32.totalorder %s120, %s122
      %p129 = scmp.eq.s32.totalorder %s28, 1
      %p130 = por %p128, %p129
      %p131 = scmp.ne.s32.totalorder %s122, %s123
      %p132 = scmp.eq.s32.totalorder %s28, 0
      %p133 = por %p131, %p132
      %p134 = scmp.ne.s32.totalorder %s122, %s123
      %p135 = scmp.eq.s32.totalorder %s29, 1
      %p136 = por %p134, %p135
      %p138 = scmp.ne.s32.totalorder %s123, %s137
      %p139 = scmp.eq.s32.totalorder %s29, 0
      %p140 = por %p138, %p139
      %s142 = sadd.s32 %s141, 1
      %p145 = scmp.eq.s32.totalorder %s23, 1
      %p146 = scmp.ne.s32.totalorder %s141, %s143
      %p147 = scmp.eq.s32.totalorder %s23, 0
      %p148 = por %p146, %p147
      %p149 = scmp.ne.s32.totalorder %s141, %s143
      %p150 = scmp.eq.s32.totalorder %s28, 1
      %p151 = por %p149, %p150
      %p152 = scmp.ne.s32.totalorder %s143, %s144
      %p153 = scmp.eq.s32.totalorder %s28, 0
      %p154 = por %p152, %p153
      %p155 = scmp.ne.s32.totalorder %s143, %s144
      %p156 = scmp.eq.s32.totalorder %s29, 1
      %p157 = por %p155, %p156
      %p159 = scmp.ne.s32.totalorder %s144, %s158
      %p160 = scmp.eq.s32.totalorder %s29, 0
      %p161 = por %p159, %p160
      %s163 = sadd.s32 %s162, 1
      %p166 = scmp.eq.s32.totalorder %s23, 1
      %p167 = scmp.ne.s32.totalorder %s162, %s164
      %p168 = scmp.eq.s32.totalorder %s23, 0
      %p169 = por %p167, %p168
      %p170 = scmp.ne.s32.totalorder %s162, %s164
      %p171 = scmp.eq.s32.totalorder %s28, 1
      %p172 = por %p170, %p171
      %p173 = scmp.ne.s32.totalorder %s164, %s165
      %p174 = scmp.eq.s32.totalorder %s28, 0
      %p175 = por %p173, %p174
      %p176 = scmp.ne.s32.totalorder %s164, %s165
      %p177 = scmp.eq.s32.totalorder %s29, 1
      %p178 = por %p176, %p177
      %p180 = scmp.ne.s32.totalorder %s165, %s179
      %p181 = scmp.eq.s32.totalorder %s29, 0
      %p182 = por %p180, %p181
      %s184 = sadd.s32 %s183, 1
      %p187 = scmp.eq.s32.totalorder %s23, 1
      %p188 = scmp.ne.s32.totalorder %s183, %s185
      %p189 = scmp.eq.s32.totalorder %s23, 0
      %p190 = por %p188, %p189
      %p191 = scmp.ne.s32.totalorder %s183, %s185
      %p192 = scmp.eq.s32.totalorder %s28, 1
      %p193 = por %p191, %p192
      %p194 = scmp.ne.s32.totalorder %s185, %s186
      %p195 = scmp.eq.s32.totalorder %s28, 0
      %p196 = por %p194, %p195
      %p197 = scmp.ne.s32.totalorder %s185, %s186
      %p198 = scmp.eq.s32.totalorder %s29, 1
      %p199 = por %p197, %p198
      %p201 = scmp.ne.s32.totalorder %s186, %s200
      %p202 = scmp.eq.s32.totalorder %s29, 0
      %p203 = por %p201, %p202
      %s205 = sadd.s32 %s204, 1
      %p208 = scmp.eq.s32.totalorder %s23, 1
      %p209 = scmp.ne.s32.totalorder %s204, %s206
      %p210 = scmp.eq.s32.totalorder %s23, 0
      %p211 = por %p209, %p210
      %p212 = scmp.ne.s32.totalorder %s204, %s206
      %p213 = scmp.eq.s32.totalorder %s28, 1
      %p214 = por %p212, %p213
      %p215 = scmp.ne.s32.totalorder %s206, %s207
      %p216 = scmp.eq.s32.totalorder %s28, 0
      %p217 = por %p215, %p216
      %p218 = scmp.ne.s32.totalorder %s206, %s207
      %p219 = scmp.eq.s32.totalorder %s29, 1
      %p220 = por %p218, %p219
      %p222 = scmp.ne.s32.totalorder %s207, %s221
      %p223 = scmp.eq.s32.totalorder %s29, 0
      %p224 = por %p222, %p223
      %s226 = sadd.s32 %s225, 1
      %p229 = scmp.eq.s32.totalorder %s23, 1
      %p230 = scmp.ne.s32.totalorder %s225, %s227
      %p231 = scmp.eq.s32.totalorder %s23, 0
      %p232 = por %p230, %p231
      %p233 = scmp.ne.s32.totalorder %s225, %s227
      %p234 = scmp.eq.s32.totalorder %s28, 1
      %p235 = por %p233, %p234
      %p236 = scmp.ne.s32.totalorder %s227, %s228
      %p237 = scmp.eq.s32.totalorder %s28, 0
      %p238 = por %p236, %p237
      %p239 = scmp.ne.s32.totalorder %s227, %s228
      %p240 = scmp.eq.s32.totalorder %s29, 1
      %p241 = por %p239, %p240
      %p243 = scmp.ne.s32.totalorder %s228, %s242
      %p244 = scmp.eq.s32.totalorder %s29, 0
      %p245 = por %p243, %p244
      %s246 = ssub.s32 %s23, %s30
      %p247 = scmp.eq.s32.totalorder %s246, 0
      %s249 = sadd.s32 %s248, 1
      %s250 = scalar_select %p247, %s248, %s249
      %p253 = pneg %p247
      %p254 = scmp.eq.s32.totalorder %s23, 1
      %p255 = por %p253, %p254
      %p256 = scmp.ne.s32.totalorder %s248, %s251
      %p257 = scmp.eq.s32.totalorder %s23, 0
      %p258 = por %p256, %p257
      %p259 = scmp.ne.s32.totalorder %s248, %s251
      %p260 = scmp.eq.s32.totalorder %s28, 1
      %p261 = por %p259, %p260
      %p262 = scmp.ne.s32.totalorder %s251, %s252
      %p263 = scmp.eq.s32.totalorder %s28, 0
      %p264 = por %p262, %p263
      %p265 = scmp.ne.s32.totalorder %s251, %s252
      %p266 = scmp.eq.s32.totalorder %s29, 1
      %p267 = por %p265, %p266
      %p269 = scmp.ne.s32.totalorder %s252, %s268
      %p270 = scmp.eq.s32.totalorder %s29, 0
      %p271 = por %p269, %p270
      %p272 = scmp.le.s32.totalorder 1, %s23
      %p273 = scmp.lt.s32.totalorder %s23, 3
      %p274 = pnand %p272, %p273
      %p275 = pneg %p274
      // Predicated region
      $region9: #{tpu_custom_call.1} parent=5 // pred_check
        _
      $region10: #{tpu_custom_call.1} parent=5 // pred_check_branch
        %277 = sbr.rel (%p274) target = $region12
      $region11: #{tpu_custom_call.1} parent=5 // pred_region
        %s278 = ssub.s32 %s23, 1
        // Predicated region
        $region13: #{tpu_custom_call.1} parent=11 // pred_check
          %p279 = pneg %p70
        $region14: #{tpu_custom_call.1} parent=11 // pred_check_branch
          %281 = sbr.rel (%p279) target = $region16
        $region15: #{tpu_custom_call.1} parent=11 // pred_region
          _
        $region16: #{tpu_custom_call.1} parent=11 // pred_fallthru
          _
        // Predicated region
        $region17: #{tpu_custom_call.1} parent=11 // pred_check
          %p282 = pneg %p91
        $region18: #{tpu_custom_call.1} parent=11 // pred_check_branch
          %284 = sbr.rel (%p282) target = $region20
        $region19: #{tpu_custom_call.1} parent=11 // pred_region
          %s286 = ssub.s32 8192, 8192
          %287 = vsyncadd [#allocation5], %s286
          %s288 = sshll.u32 [#allocation4], 4
          %s289 = int_to_ptr.vmem [resolvable:$true] %s288
          %294 = dma.hbm_to_vmem [thread:$0]  %s2, 8192, %s289, [#allocation5], 64, 64, 4
        $region20: #{tpu_custom_call.1} parent=11 // pred_fallthru
          _
        // Predicated region
        $region21: #{tpu_custom_call.1} parent=11 // pred_check
          %p295 = pneg %p112
        $region22: #{tpu_custom_call.1} parent=11 // pred_check_branch
          %297 = sbr.rel (%p295) target = $region24
        $region23: #{tpu_custom_call.1} parent=11 // pred_region
          _
        $region24: #{tpu_custom_call.1} parent=11 // pred_fallthru
          _
        // Predicated region
        $region25: #{tpu_custom_call.1} parent=11 // pred_check
          %p298 = pneg %p133
        $region26: #{tpu_custom_call.1} parent=11 // pred_check_branch
          %300 = sbr.rel (%p298) target = $region28
        $region27: #{tpu_custom_call.1} parent=11 // pred_region
          %s302 = ssub.s32 8192, 8192
          %303 = vsyncadd [#allocation8], %s302
          %s304 = sshll.u32 [#allocation7], 4
          %s305 = int_to_ptr.vmem [resolvable:$true] %s304
          %310 = dma.hbm_to_vmem [thread:$0]  %s4, 8192, %s305, [#allocation8], 64, 64, 4
        $region28: #{tpu_custom_call.1} parent=11 // pred_fallthru
          _
        // Predicated region
        $region29: #{tpu_custom_call.1} parent=11 // pred_check
          %p311 = pneg %p154
        $region30: #{tpu_custom_call.1} parent=11 // pred_check_branch
          %313 = sbr.rel (%p311) target = $region32
        $region31: #{tpu_custom_call.1} parent=11 // pred_region
          _
        $region32: #{tpu_custom_call.1} parent=11 // pred_fallthru
          _
        // Predicated region
        $region33: #{tpu_custom_call.1} parent=11 // pred_check
          %p314 = pneg %p175
        $region34: #{tpu_custom_call.1} parent=11 // pred_check_branch
          %316 = sbr.rel (%p314) target = $region36
        $region35: #{tpu_custom_call.1} parent=11 // pred_region
          %s318 = ssub.s32 1024, 1024
          %319 = vsyncadd [#allocation8], %s318
          %s320 = sshll.u32 [#allocation9], 4
          %s321 = int_to_ptr.vmem [resolvable:$true] %s320
          %326 = dma.hbm_to_vmem [thread:$0]  %s6, 1024, %s321, [#allocation8], 64, 64, 4
        $region36: #{tpu_custom_call.1} parent=11 // pred_fallthru
          _
        // Predicated region
        $region37: #{tpu_custom_call.1} parent=11 // pred_check
          %p327 = pneg %p196
        $region38: #{tpu_custom_call.1} parent=11 // pred_check_branch
          %329 = sbr.rel (%p327) target = $region40
        $region39: #{tpu_custom_call.1} parent=11 // pred_region
          _
        $region40: #{tpu_custom_call.1} parent=11 // pred_fallthru
          _
        // Predicated region
        $region41: #{tpu_custom_call.1} parent=11 // pred_check
          %p330 = pneg %p217
        $region42: #{tpu_custom_call.1} parent=11 // pred_check_branch
          %332 = sbr.rel (%p330) target = $region44
        $region43: #{tpu_custom_call.1} parent=11 // pred_region
          _
        $region44: #{tpu_custom_call.1} parent=11 // pred_fallthru
          _
        // Predicated region
        $region45: #{tpu_custom_call.1} parent=11 // pred_check
          %p333 = pneg %p238
        $region46: #{tpu_custom_call.1} parent=11 // pred_check_branch
          %335 = sbr.rel (%p333) target = $region48
        $region47: #{tpu_custom_call.1} parent=11 // pred_region
          _
        $region48: #{tpu_custom_call.1} parent=11 // pred_fallthru
          _
      $region12: #{tpu_custom_call.1} parent=5 // pred_fallthru
        _
      %p336 = scmp.lt.s32.totalorder %s23, 2
      // Predicated region
      $region49: #{tpu_custom_call.1} parent=5 // pred_check
        %p337 = pneg %p336
      $region50: #{tpu_custom_call.1} parent=5 // pred_check_branch
        %339 = sbr.rel (%p337) target = $region52
      $region51: #{tpu_custom_call.1} parent=5 // pred_region
        // Predicated region
        $region53: #{tpu_custom_call.1} parent=51 // pred_check
          %p340 = pneg %p43
        $region54: #{tpu_custom_call.1} parent=51 // pred_check_branch
          %342 = sbr.rel (%p340) target = $region56
        $region55: #{tpu_custom_call.1} parent=51 // pred_region
          %s343 = smul.u32 3, %s23
          %p344 = scmp.lt.s32.totalorder %s343, 5
          %s345 = scalar_select %p344, %s343, 5
          %s346 = smul.addr %s345, 4
          %s347 = scalar_lea.vmem %s0, %s346
          %s348 = smul.u32 3, %s23
        $region56: #{tpu_custom_call.1} parent=51 // pred_fallthru
          _
      $region52: #{tpu_custom_call.1} parent=5 // pred_fallthru
        _
      %p349 = scmp.le.s32.totalorder 1, %s23
      %p350 = scmp.lt.s32.totalorder %s23, 3
      %p351 = pnand %p349, %p350
      %p352 = pneg %p351
      // Predicated region
      $region57: #{tpu_custom_call.1} parent=5 // pred_check
        _
      $region58: #{tpu_custom_call.1} parent=5 // pred_check_branch
        %354 = sbr.rel (%p351) target = $region60
      $region59: #{tpu_custom_call.1} parent=5 // pred_region
        %s355 = ssub.s32 %s23, 1
        // Predicated region
        $region61: #{tpu_custom_call.1} parent=59 // pred_check
          %p356 = pneg %p91
        $region62: #{tpu_custom_call.1} parent=59 // pred_check_branch
          %358 = sbr.rel (%p356) target = $region64
        $region63: #{tpu_custom_call.1} parent=59 // pred_region
          %359 = dma.done [#allocation5], 8192
        $region64: #{tpu_custom_call.1} parent=59 // pred_fallthru
          _
        // Predicated region
        $region65: #{tpu_custom_call.1} parent=59 // pred_check
          %p360 = pneg %p133
        $region66: #{tpu_custom_call.1} parent=59 // pred_check_branch
          %362 = sbr.rel (%p360) target = $region68
        $region67: #{tpu_custom_call.1} parent=59 // pred_region
          %363 = dma.done [#allocation8], 8192
        $region68: #{tpu_custom_call.1} parent=59 // pred_fallthru
          _
        // Predicated region
        $region69: #{tpu_custom_call.1} parent=59 // pred_check
          %p364 = pneg %p175
        $region70: #{tpu_custom_call.1} parent=59 // pred_check_branch
          %366 = sbr.rel (%p364) target = $region72
        $region71: #{tpu_custom_call.1} parent=59 // pred_region
          %367 = dma.done [#allocation8], 1024
        $region72: #{tpu_custom_call.1} parent=59 // pred_fallthru
          _
        %s368 = smul.u32 3, %s28
        %p369 = scmp.lt.s32.totalorder %s368, 5
        %s370 = scalar_select %p369, %s368, 5
        %s371 = smul.addr %s370, 4
        %s372 = scalar_lea.vmem %s0, %s371
        %p373 = pneg %p49
        %p374 = pneg %p46
        %p375 = pneg %p70
        %p376 = pneg %p67
        %p377 = pneg %p91
        %p378 = pneg %p88
        %p379 = pneg %p112
        %p380 = pneg %p109
        %p381 = pneg %p133
        %p382 = pneg %p130
        %p383 = pneg %p154
        %p384 = pneg %p151
        %p385 = pneg %p175
        %p386 = pneg %p172
        %p387 = pneg %p196
        %p388 = pneg %p193
        %p389 = pneg %p217
        %p390 = pneg %p214
        %p391 = pneg %p238
        %p392 = pneg %p235
        %p393 = pneg %p264
        %p394 = pneg %p261
        %s395 = sand.u32 %s251, 1
        %s396 = scalar_lea.sflag [#allocation6], %s395
        %s397 = sand.u32 %s251, 1
        %s398 = scalar_lea.vmem [#allocation10], %s397
        %s399 = smul.u32 3, %s28
        %p400 = scmp.lt.s32.totalorder %s399, 5
        %s401 = scalar_select %p400, %s399, 5
        %s402 = smul.addr %s401, 4
        %s403 = scalar_lea.vmem %s0, %s402
        %s404 = smul.u32 3, %s28
        %406 = vst [vmem:[#allocation2] sm:$0xff] 0.0
        %v407 = vld [vmem:[%s403] sm:$0xf]
        %v408 = vld [vmem:[%s403 + $0x4] sm:$0xf]
        %v409 = vld [vmem:[%s403 + $0x8] sm:$0xf]
        %v410 = vunpack.c.l.bf16 %v407
        %v411 = vunpack.c.l.bf16 %v408
        %v412 = vunpack.c.l.bf16 %v409
        %413 = vst [vmem:[#allocation2 + $0x8] sm:$0xff] %v410
        %414 = vst [vmem:[#allocation2 + $0x10] sm:$0xff] %v411
        %415 = vst [vmem:[#allocation2 + $0x18] sm:$0xff] %v412
        %v416 = vld [vmem:[%s1] sm:$0xff]
        %v417 = vld [vmem:[%s1 + $0x8] sm:$0xff]
        %v418 = vld [vmem:[%s1 + $0x10] sm:$0xff]
        %v419 = vld [vmem:[#allocation4] sm:$0xf]
        %v420 = vld [vmem:[#allocation4 + $0x4] sm:$0xf]
        %v421 = vld [vmem:[#allocation4 + $0x8] sm:$0xf]
        %v422 = vld [vmem:[#allocation4 + $0xc] sm:$0xf]
        %v423 = vld [vmem:[#allocation4 + $0x10] sm:$0xf]
        %v424 = vld [vmem:[#allocation4 + $0x14] sm:$0xf]
        %v425 = vld [vmem:[#allocation4 + $0x18] sm:$0xf]
        %v426 = vld [vmem:[#allocation4 + $0x1c] sm:$0xf]
        %v427 = vld [vmem:[#allocation4 + $0x20] sm:$0xf]
        %v428 = vld [vmem:[#allocation4 + $0x24] sm:$0xf]
        %v429 = vld [vmem:[#allocation4 + $0x28] sm:$0xf]
        %v430 = vld [vmem:[#allocation4 + $0x2c] sm:$0xf]
        %v431 = vld [vmem:[#allocation4 + $0x30] sm:$0xf]
        %v432 = vld [vmem:[#allocation4 + $0x34] sm:$0xf]
        %v433 = vld [vmem:[#allocation4 + $0x38] sm:$0xf]
        %v434 = vld [vmem:[#allocation4 + $0x3c] sm:$0xf]
        %v435 = vld [vmem:[#allocation4 + $0x40] sm:$0xf]
        %v436 = vld [vmem:[#allocation4 + $0x44] sm:$0xf]
        %v437 = vld [vmem:[#allocation4 + $0x48] sm:$0xf]
        %v438 = vld [vmem:[#allocation4 + $0x4c] sm:$0xf]
        %v439 = vld [vmem:[#allocation4 + $0x50] sm:$0xf]
        %v440 = vld [vmem:[#allocation4 + $0x54] sm:$0xf]
        %v441 = vld [vmem:[#allocation4 + $0x58] sm:$0xf]
        %v442 = vld [vmem:[#allocation4 + $0x5c] sm:$0xf]
        %v443 = vld [vmem:[#allocation4 + $0x60] sm:$0xf]
        %v444 = vld [vmem:[#allocation4 + $0x64] sm:$0xf]
        %v445 = vld [vmem:[#allocation4 + $0x68] sm:$0xf]
        %v446 = vld [vmem:[#allocation4 + $0x6c] sm:$0xf]
        %v447 = vld [vmem:[#allocation4 + $0x70] sm:$0xf]
        %v448 = vld [vmem:[#allocation4 + $0x74] sm:$0xf]
        %v449 = vld [vmem:[#allocation4 + $0x78] sm:$0xf]
        %v450 = vld [vmem:[#allocation4 + $0x7c] sm:$0xf]
        %v451 = vld [vmem:[#allocation7] sm:$0xf]
        %v452 = vld [vmem:[#allocation7 + $0x4] sm:$0xf]
        %v453 = vld [vmem:[#allocation7 + $0x8] sm:$0xf]
        %v454 = vld [vmem:[#allocation7 + $0xc] sm:$0xf]
        %v455 = vld [vmem:[#allocation7 + $0x10] sm:$0xf]
        %v456 = vld [vmem:[#allocation7 + $0x14] sm:$0xf]
        %v457 = vld [vmem:[#allocation7 + $0x18] sm:$0xf]
        %v458 = vld [vmem:[#allocation7 + $0x1c] sm:$0xf]
        %v459 = vld [vmem:[#allocation7 + $0x20] sm:$0xf]
        %v460 = vld [vmem:[#allocation7 + $0x24] sm:$0xf]
        %v461 = vld [vmem:[#allocation7 + $0x28] sm:$0xf]
        %v462 = vld [vmem:[#allocation7 + $0x2c] sm:$0xf]
        %v463 = vld [vmem:[#allocation7 + $0x30] sm:$0xf]
        %v464 = vld [vmem:[#allocation7 + $0x34] sm:$0xf]
        %v465 = vld [vmem:[#allocation7 + $0x38] sm:$0xf]
        %v466 = vld [vmem:[#allocation7 + $0x3c] sm:$0xf]
        %v467 = vld [vmem:[#allocation7 + $0x40] sm:$0xf]
        %v468 = vld [vmem:[#allocation7 + $0x44] sm:$0xf]
        %v469 = vld [vmem:[#allocation7 + $0x48] sm:$0xf]
        %v470 = vld [vmem:[#allocation7 + $0x4c] sm:$0xf]
        %v471 = vld [vmem:[#allocation7 + $0x50] sm:$0xf]
        %v472 = vld [vmem:[#allocation7 + $0x54] sm:$0xf]
        %v473 = vld [vmem:[#allocation7 + $0x58] sm:$0xf]
        %v474 = vld [vmem:[#allocation7 + $0x5c] sm:$0xf]
        %v475 = vld [vmem:[#allocation7 + $0x60] sm:$0xf]
        %v476 = vld [vmem:[#allocation7 + $0x64] sm:$0xf]
        %v477 = vld [vmem:[#allocation7 + $0x68] sm:$0xf]
        %v478 = vld [vmem:[#allocation7 + $0x6c] sm:$0xf]
        %v479 = vld [vmem:[#allocation7 + $0x70] sm:$0xf]
        %v480 = vld [vmem:[#allocation7 + $0x74] sm:$0xf]
        %v481 = vld [vmem:[#allocation7 + $0x78] sm:$0xf]
        %v482 = vld [vmem:[#allocation7 + $0x7c] sm:$0xf]
        %v483 = vld [vmem:[%s3] sm:$0x1]
        %v484 = vld [vmem:[%s5] sm:$0x1]
        %v485 = vld [vmem:[#allocation2] sm:$0xff]
        %v486 = vld [vmem:[#allocation2 + $0x8] sm:$0xff]
        %v487 = vld [vmem:[#allocation2 + $0x10] sm:$0xff]
        %v488 = vld [vmem:[#allocation2 + $0x18] sm:$0xff]
        %v489 = vpack.c.bf16 %v487, %v486
        %v490 = vpack.c.bf16 %v488, %v488
        %v491 = vpack.c.bf16 %v486, %v485
        %v492 = vpack.c.bf16 %v488, %v487
        %vm493 = vsmask.f32 3328
        %v495 = vshrl.u32 %v489, 16
        %v497 = vrot.slane %v495, 4
        %v498 = vshll.u32 %v489, 16
        %v500 = vrot.slane %v498, 5
        %v501 = vor.u32 %v497, %v500
        %v503 = vshrl.u32 %v490, 16
        %v505 = vrot.slane %v503, 4
        %v506 = vshll.u32 %v490, 16
        %v508 = vrot.slane %v506, 5
        %v509 = vor.u32 %v505, %v508
        %v510 = vsel %vm493, %v501, %v509
        %v512 = vlaneseq
        %v513 = vshrl.u32 %v512, 7
        %v514 = vsub.s32 0, %v513
        %v515 = vrot.slane %v483, %v514
        %vm517 = vsmask.f32 4352
        %v519 = vshrl.u32 %v491, 16
        %v521 = vrot.slane %v519, 3
        %v522 = vshll.u32 %v491, 16
        %v524 = vrot.slane %v522, 4
        %v525 = vor.u32 %v521, %v524
        %v527 = vshrl.u32 %v492, 16
        %v529 = vrot.slane %v527, 3
        %v530 = vshll.u32 %v492, 16
        %v532 = vrot.slane %v530, 4
        %v533 = vor.u32 %v529, %v532
        %v534 = vsel %vm517, %v525, %v533
        %v536 = vshrl.u32 %v501, 16
        %v538 = vrot.slane %v536, 3
        %v539 = vshll.u32 %v501, 16
        %v541 = vrot.slane %v539, 4
        %v542 = vor.u32 %v538, %v541
        %v544 = vshrl.u32 %v510, 16
        %v546 = vrot.slane %v544, 3
        %v547 = vshll.u32 %v510, 16
        %v549 = vrot.slane %v547, 4
        %v550 = vor.u32 %v546, %v549
        %v551 = vsel %vm517, %v542, %v550
        %v588 = vunpack.c.l.b16 %v419
        %v589 = vunpack.c.l.b16 %v420
        %v590 = vunpack.c.l.b16 %v421
        %v591 = vunpack.c.l.b16 %v422
        %v592 = vunpack.c.l.b16 %v423
        %v593 = vunpack.c.l.b16 %v424
        %v594 = vunpack.c.l.b16 %v425
        %v595 = vunpack.c.l.b16 %v426
        %v596 = vunpack.c.l.b16 %v427
        %v597 = vunpack.c.l.b16 %v428
        %v598 = vunpack.c.l.b16 %v429
        %v599 = vunpack.c.l.b16 %v430
        %v600 = vunpack.c.l.b16 %v431
        %v601 = vunpack.c.l.b16 %v432
        %v602 = vunpack.c.l.b16 %v433
        %v603 = vunpack.c.l.b16 %v434
        %v604 = vunpack.c.l.b16 %v435
        %v605 = vunpack.c.l.b16 %v436
        %v606 = vunpack.c.l.b16 %v437
        %v607 = vunpack.c.l.b16 %v438
        %v608 = vunpack.c.l.b16 %v439
        %v609 = vunpack.c.l.b16 %v440
        %v610 = vunpack.c.l.b16 %v441
        %v611 = vunpack.c.l.b16 %v442
        %v612 = vunpack.c.l.b16 %v443
        %v613 = vunpack.c.l.b16 %v444
        %v614 = vunpack.c.l.b16 %v445
        %v615 = vunpack.c.l.b16 %v446
        %v616 = vunpack.c.l.b16 %v447
        %v617 = vunpack.c.l.b16 %v448
        %v618 = vunpack.c.l.b16 %v449
        %v619 = vunpack.c.l.b16 %v450
        %v620 = vpack.c.b16 %v589, %v588
        %v621 = vpack.c.b16 %v591, %v590
        %v622 = vpack.c.b16 %v593, %v592
        %v623 = vpack.c.b16 %v595, %v594
        %v624 = vpack.c.b16 %v597, %v596
        %v625 = vpack.c.b16 %v599, %v598
        %v626 = vpack.c.b16 %v601, %v600
        %v627 = vpack.c.b16 %v603, %v602
        %v628 = vpack.c.b16 %v605, %v604
        %v629 = vpack.c.b16 %v607, %v606
        %v630 = vpack.c.b16 %v609, %v608
        %v631 = vpack.c.b16 %v611, %v610
        %v632 = vpack.c.b16 %v613, %v612
        %v633 = vpack.c.b16 %v615, %v614
        %v634 = vpack.c.b16 %v617, %v616
        %v635 = vpack.c.b16 %v619, %v618
        %652 = vmatprep.subr.bf16.mxu0 0
        %653 = vmatpush1.bf16.msra.mxu0 %v620
        %654 = vmatprep.subr.bf16.mxu0 0
        %655 = vmatpush1.bf16.msra.mxu0 %v621
        %656 = vmatprep.subr.bf16.mxu0 0
        %657 = vmatpush1.bf16.msra.mxu0 %v622
        %658 = vmatprep.subr.bf16.mxu0 0
        %659 = vmatpush1.bf16.msra.mxu0 %v623
        %660 = vmatprep.subr.bf16.mxu0 0
        %661 = vmatpush1.bf16.msra.mxu0 %v624
        %662 = vmatprep.subr.bf16.mxu0 0
        %663 = vmatpush1.bf16.msra.mxu0 %v625
        %664 = vmatprep.subr.bf16.mxu0 0
        %665 = vmatpush1.bf16.msra.mxu0 %v626
        %666 = vmatprep.subr.bf16.mxu0 0
        %667 = vmatpush1.bf16.msra.mxu0 %v627
        %668 = vmatprep.subr.bf16.mxu0 0
        %669 = vmatpush1.bf16.msra.mxu0 %v628
        %670 = vmatprep.subr.bf16.mxu0 0
        %671 = vmatpush1.bf16.msra.mxu0 %v629
        %672 = vmatprep.subr.bf16.mxu0 0
        %673 = vmatpush1.bf16.msra.mxu0 %v630
        %674 = vmatprep.subr.bf16.mxu0 0
        %675 = vmatpush1.bf16.msra.mxu0 %v631
        %676 = vmatprep.subr.bf16.mxu0 0
        %677 = vmatpush1.bf16.msra.mxu0 %v632
        %678 = vmatprep.subr.bf16.mxu0 0
        %679 = vmatpush1.bf16.msra.mxu0 %v633
        %680 = vmatprep.subr.bf16.mxu0 0
        %681 = vmatpush1.bf16.msra.mxu0 %v634
        %682 = vmatprep.subr.bf16.mxu0 0
        %683 = vmatpush1.bf16.msra.mxu0 %v635
        %684 = vmatprep.mubr.bf16.mxu0 %v551
        %685 = vmatmul.mubr.bf16.gmra.mrb[0].mxu0 %v534
        %v686 = vpop.f32.mrb[0].mxu0
        %v687 = vadd.f32 %v515, %v686
        %v688 = vpop.f32.mrb[0].mxu0
        %v689 = vpop.f32.mrb[0].mxu0
        %v690 = vadd.f32 %v515, %v689
        %v691 = vpop.f32.mrb[0].mxu0
        %692 = vmatprep.mubr.bf16.mxu0 %v550
        %693 = vmatmul.mubr.bf16.gmra.mrb[0].mxu0 %v533
        %v694 = vpop.f32.mrb[0].mxu0
        %v695 = vadd.f32 %v515, %v694
        %v696 = vpop.f32.mrb[0].mxu0
        %v697 = vpop.f32.mrb[0].mxu0
        %v698 = vpop.f32.mrb[0].mxu0
        %699 = vdwg.mxu0
        %v700 = vmax.f32 %v687, 0.0
        %v701 = vmax.f32 %v690, 0.0
        %v702 = vmax.f32 %v695, 0.0
        %704 = vset.pattern.permute.xlu0 0
        %705 = vperm.xlu0 %704, %v416
        %v706 = vpop.permute.xlu0 %705
        %709 = vset.pattern.permute.xlu0 0
        %710 = vperm.xlu0 %709, %v417
        %v711 = vpop.permute.xlu0 %710
        %714 = vset.pattern.permute.xlu0 0
        %715 = vperm.xlu0 %714, %v418
        %v716 = vpop.permute.xlu0 %715
        %v718 = vmul.f32 %v706, %v700
        %v719 = vmul.f32 %v711, %v701
        %v720 = vmul.f32 %v716, %v702
        %vm724 = vcmask 1040384
        %v725 = vrot.slane %v718, 7
        %v726 = vrot.slane %v719, 7
        %v727 = vsel %vm724, %v725, %v726
        %v728 = vrot.slane %v720, 7
        %v729 = vsel %vm724, %v726, %v728
        %v733 = vsel %vm724, 0.0, %v725
        %v734 = vpack.c.bf16 %v727, %v733
        %v735 = vpack.c.bf16 %v729, %v729
        %v736 = vpack.c.bf16 %v719, %v718
        %v737 = vpack.c.bf16 %v720, %v720
        %v739 = vlaneseq
        %v740 = vshrl.u32 %v739, 7
        %v741 = vsub.s32 0, %v740
        %v742 = vrot.slane %v484, %v741
        %v776 = vunpack.c.l.b16 %v451
        %v777 = vunpack.c.l.b16 %v452
        %v778 = vunpack.c.l.b16 %v453
        %v779 = vunpack.c.l.b16 %v454
        %v780 = vunpack.c.l.b16 %v455
        %v781 = vunpack.c.l.b16 %v456
        %v782 = vunpack.c.l.b16 %v457
        %v783 = vunpack.c.l.b16 %v458
        %v784 = vunpack.c.l.b16 %v459
        %v785 = vunpack.c.l.b16 %v460
        %v786 = vunpack.c.l.b16 %v461
        %v787 = vunpack.c.l.b16 %v462
        %v788 = vunpack.c.l.b16 %v463
        %v789 = vunpack.c.l.b16 %v464
        %v790 = vunpack.c.l.b16 %v465
        %v791 = vunpack.c.l.b16 %v466
        %v792 = vunpack.c.l.b16 %v467
        %v793 = vunpack.c.l.b16 %v468
        %v794 = vunpack.c.l.b16 %v469
        %v795 = vunpack.c.l.b16 %v470
        %v796 = vunpack.c.l.b16 %v471
        %v797 = vunpack.c.l.b16 %v472
        %v798 = vunpack.c.l.b16 %v473
        %v799 = vunpack.c.l.b16 %v474
        %v800 = vunpack.c.l.b16 %v475
        %v801 = vunpack.c.l.b16 %v476
        %v802 = vunpack.c.l.b16 %v477
        %v803 = vunpack.c.l.b16 %v478
        %v804 = vunpack.c.l.b16 %v479
        %v805 = vunpack.c.l.b16 %v480
        %v806 = vunpack.c.l.b16 %v481
        %v807 = vunpack.c.l.b16 %v482
        %v808 = vpack.c.b16 %v777, %v776
        %v809 = vpack.c.b16 %v779, %v778
        %v810 = vpack.c.b16 %v781, %v780
        %v811 = vpack.c.b16 %v783, %v782
        %v812 = vpack.c.b16 %v785, %v784
        %v813 = vpack.c.b16 %v787, %v786
        %v814 = vpack.c.b16 %v789, %v788
        %v815 = vpack.c.b16 %v791, %v790
        %v816 = vpack.c.b16 %v793, %v792
        %v817 = vpack.c.b16 %v795, %v794
        %v818 = vpack.c.b16 %v797, %v796
        %v819 = vpack.c.b16 %v799, %v798
        %v820 = vpack.c.b16 %v801, %v800
        %v821 = vpack.c.b16 %v803, %v802
        %v822 = vpack.c.b16 %v805, %v804
        %v823 = vpack.c.b16 %v807, %v806
        %840 = vmatprep.subr.bf16.mxu0 0
        %841 = vmatpush1.bf16.msra.mxu0 %v808
        %842 = vmatprep.subr.bf16.mxu0 0
        %843 = vmatpush1.bf16.msra.mxu0 %v809
        %844 = vmatprep.subr.bf16.mxu0 0
        %845 = vmatpush1.bf16.msra.mxu0 %v810
        %846 = vmatprep.subr.bf16.mxu0 0
        %847 = vmatpush1.bf16.msra.mxu0 %v811
        %848 = vmatprep.subr.bf16.mxu0 0
        %849 = vmatpush1.bf16.msra.mxu0 %v812
        %850 = vmatprep.subr.bf16.mxu0 0
        %851 = vmatpush1.bf16.msra.mxu0 %v813
        %852 = vmatprep.subr.bf16.mxu0 0
        %853 = vmatpush1.bf16.msra.mxu0 %v814
        %854 = vmatprep.subr.bf16.mxu0 0
        %855 = vmatpush1.bf16.msra.mxu0 %v815
        %856 = vmatprep.subr.bf16.mxu0 0
        %857 = vmatpush1.bf16.msra.mxu0 %v816
        %858 = vmatprep.subr.bf16.mxu0 0
        %859 = vmatpush1.bf16.msra.mxu0 %v817
        %860 = vmatprep.subr.bf16.mxu0 0
        %861 = vmatpush1.bf16.msra.mxu0 %v818
        %862 = vmatprep.subr.bf16.mxu0 0
        %863 = vmatpush1.bf16.msra.mxu0 %v819
        %864 = vmatprep.subr.bf16.mxu0 0
        %865 = vmatpush1.bf16.msra.mxu0 %v820
        %866 = vmatprep.subr.bf16.mxu0 0
        %867 = vmatpush1.bf16.msra.mxu0 %v821
        %868 = vmatprep.subr.bf16.mxu0 0
        %869 = vmatpush1.bf16.msra.mxu0 %v822
        %870 = vmatprep.subr.bf16.mxu0 0
        %871 = vmatpush1.bf16.msra.mxu0 %v823
        %872 = vmatprep.mubr.bf16.mxu0 %v736
        %873 = vmatmul.mubr.bf16.gmra.mrb[0].mxu0 %v734
        %v874 = vpop.f32.mrb[0].mxu0
        %v875 = vadd.f32 %v742, %v874
        %v876 = vpop.f32.mrb[0].mxu0
        %v877 = vpop.f32.mrb[0].mxu0
        %v878 = vadd.f32 %v742, %v877
        %v879 = vpop.f32.mrb[0].mxu0
        %880 = vmatprep.mubr.bf16.mxu0 %v737
        %881 = vmatmul.mubr.bf16.gmra.mrb[0].mxu0 %v735
        %v882 = vpop.f32.mrb[0].mxu0
        %v883 = vadd.f32 %v742, %v882
        %v884 = vpop.f32.mrb[0].mxu0
        %v885 = vpop.f32.mrb[0].mxu0
        %v886 = vpop.f32.mrb[0].mxu0
        %887 = vdwg.mxu0
        %v888 = vmax.f32 %v875, 0.0
        %v889 = vmax.f32 %v878, 0.0
        %v890 = vmax.f32 %v883, 0.0
        %v891 = vld [vmem:[#allocation9] sm:$0xf]
        %v892 = vld [vmem:[#allocation9 + $0x4] sm:$0xf]
        %v893 = vld [vmem:[#allocation9 + $0x8] sm:$0xf]
        %v894 = vld [vmem:[#allocation9 + $0xc] sm:$0xf]
        %v895 = vld [vmem:[#allocation9 + $0x10] sm:$0xf]
        %v896 = vld [vmem:[#allocation9 + $0x14] sm:$0xf]
        %v897 = vld [vmem:[#allocation9 + $0x18] sm:$0xf]
        %v898 = vld [vmem:[#allocation9 + $0x1c] sm:$0xf]
        %v899 = vld [vmem:[#allocation9 + $0x20] sm:$0xf]
        %v900 = vld [vmem:[#allocation9 + $0x24] sm:$0xf]
        %v901 = vld [vmem:[#allocation9 + $0x28] sm:$0xf]
        %v902 = vld [vmem:[#allocation9 + $0x2c] sm:$0xf]
        %v903 = vld [vmem:[#allocation9 + $0x30] sm:$0xf]
        %v904 = vld [vmem:[#allocation9 + $0x34] sm:$0xf]
        %v905 = vld [vmem:[#allocation9 + $0x38] sm:$0xf]
        %v906 = vld [vmem:[#allocation9 + $0x3c] sm:$0xf]
        %v907 = vld [vmem:[%s7] sm:$0x1]
        %v909 = vlaneseq
        %v910 = vshrl.u32 %v909, 7
        %v911 = vsub.s32 0, %v910
        %v912 = vrot.slane %v907, %v911
        %v930 = vunpack.c.l.b16 %v891
        %v931 = vunpack.c.l.b16 %v892
        %v932 = vunpack.c.l.b16 %v893
        %v933 = vunpack.c.l.b16 %v894
        %v934 = vunpack.c.l.b16 %v895
        %v935 = vunpack.c.l.b16 %v896
        %v936 = vunpack.c.l.b16 %v897
        %v937 = vunpack.c.l.b16 %v898
        %v938 = vunpack.c.l.b16 %v899
        %v939 = vunpack.c.l.b16 %v900
        %v940 = vunpack.c.l.b16 %v901
        %v941 = vunpack.c.l.b16 %v902
        %v942 = vunpack.c.l.b16 %v903
        %v943 = vunpack.c.l.b16 %v904
        %v944 = vunpack.c.l.b16 %v905
        %v945 = vunpack.c.l.b16 %v906
        %v946 = vpack.c.b16 %v931, %v930
        %v947 = vpack.c.b16 %v933, %v932
        %v948 = vpack.c.b16 %v935, %v934
        %v949 = vpack.c.b16 %v937, %v936
        %v950 = vpack.c.b16 %v939, %v938
        %v951 = vpack.c.b16 %v941, %v940
        %v952 = vpack.c.b16 %v943, %v942
        %v953 = vpack.c.b16 %v945, %v944
        %962 = vmatprep.subr.bf16.mxu0 0
        %963 = vmatpush1.bf16.msra.mxu0 %v946
        %964 = vmatprep.subr.bf16.mxu0 0
        %965 = vmatpush1.bf16.msra.mxu0 %v947
        %966 = vmatprep.subr.bf16.mxu0 0
        %967 = vmatpush1.bf16.msra.mxu0 %v948
        %968 = vmatprep.subr.bf16.mxu0 0
        %969 = vmatpush1.bf16.msra.mxu0 %v949
        %970 = vmatprep.subr.bf16.mxu0 0
        %971 = vmatpush1.bf16.msra.mxu0 %v950
        %972 = vmatprep.subr.bf16.mxu0 0
        %973 = vmatpush1.bf16.msra.mxu0 %v951
        %974 = vmatprep.subr.bf16.mxu0 0
        %975 = vmatpush1.bf16.msra.mxu0 %v952
        %976 = vmatprep.subr.bf16.mxu0 0
        %977 = vmatpush1.bf16.msra.mxu0 %v953
        %978 = vmatprep.subr.bf16.mxu0 0
        %979 = vmatpush1.bf16.msra.mxu0 0
        %980 = vmatprep.subr.bf16.mxu0 0
        %981 = vmatpush1.bf16.msra.mxu0 0
        %982 = vmatprep.subr.bf16.mxu0 0
        %983 = vmatpush1.bf16.msra.mxu0 0
        %984 = vmatprep.subr.bf16.mxu0 0
        %985 = vmatpush1.bf16.msra.mxu0 0
        %986 = vmatprep.subr.bf16.mxu0 0
        %987 = vmatpush1.bf16.msra.mxu0 0
        %988 = vmatprep.subr.bf16.mxu0 0
        %989 = vmatpush1.bf16.msra.mxu0 0
        %990 = vmatprep.subr.bf16.mxu0 0
        %991 = vmatpush1.bf16.msra.mxu0 0
        %992 = vmatprep.subr.bf16.mxu0 0
        %993 = vmatpush1.bf16.msra.mxu0 0
        %994 = vmatprep.mubr.bf16.mxu0 0
        %995 = vmatmul.mubr.bf16.gmra.mrb[0].mxu0 %v489
        %v996 = vpop.f32.mrb[0].mxu0
        %v997 = vadd.f32 %v912, %v996
        %v998 = vpop.f32.mrb[0].mxu0
        %v999 = vpop.f32.mrb[0].mxu0
        %v1000 = vadd.f32 %v912, %v999
        %v1001 = vpop.f32.mrb[0].mxu0
        %1002 = vmatprep.mubr.bf16.mxu0 0
        %1003 = vmatmul.mubr.bf16.gmra.mrb[0].mxu0 %v490
        %v1004 = vpop.f32.mrb[0].mxu0
        %v1005 = vadd.f32 %v912, %v1004
        %v1006 = vpop.f32.mrb[0].mxu0
        %v1007 = vpop.f32.mrb[0].mxu0
        %v1008 = vpop.f32.mrb[0].mxu0
        %1009 = vdwg.mxu0
        %v1010 = vadd.f32 %v888, %v997
        %v1011 = vadd.f32 %v889, %v1000
        %v1012 = vadd.f32 %v890, %v1005
        %v1013 = vmax.f32 %v1010, 0.0
        %v1014 = vmax.f32 %v1011, 0.0
        %v1015 = vmax.f32 %v1012, 0.0
        %v1016 = vmul.f32 %v706, %v1013
        %v1017 = vmul.f32 %v711, %v1014
        %v1018 = vmul.f32 %v716, %v1015
        %1019 = vst [vmem:[#allocation2 + $0x8] sm:$0xff] %v1016
        %1020 = vst [vmem:[#allocation2 + $0x10] sm:$0xff] %v1017
        %1021 = vst [vmem:[#allocation2 + $0x18] sm:$0xff] %v1018
        %s1022 = scalar_lea.vmem [#allocation4], 128
        %v1023 = vld [vmem:[%s1022] sm:$0xf]
        %v1024 = vld [vmem:[%s1022 + $0x4] sm:$0xf]
        %v1025 = vld [vmem:[%s1022 + $0x8] sm:$0xf]
        %v1026 = vld [vmem:[%s1022 + $0xc] sm:$0xf]
        %v1027 = vld [vmem:[%s1022 + $0x10] sm:$0xf]
        %v1028 = vld [vmem:[%s1022 + $0x14] sm:$0xf]
        %v1029 = vld [vmem:[%s1022 + $0x18] sm:$0xf]
        %v1030 = vld [vmem:[%s1022 + $0x1c] sm:$0xf]
        %v1031 = vld [vmem:[%s1022 + $0x20] sm:$0xf]
        %v1032 = vld [vmem:[%s1022 + $0x24] sm:$0xf]
        %v1033 = vld [vmem:[%s1022 + $0x28] sm:$0xf]
        %v1034 = vld [vmem:[%s1022 + $0x2c] sm:$0xf]
        %v1035 = vld [vmem:[%s1022 + $0x30] sm:$0xf]
        %v1036 = vld [vmem:[%s1022 + $0x34] sm:$0xf]
        %v1037 = vld [vmem:[%s1022 + $0x38] sm:$0xf]
        %v1038 = vld [vmem:[%s1022 + $0x3c] sm:$0xf]
        %v1039 = vld [vmem:[%s1022 + $0x40] sm:$0xf]
        %v1040 = vld [vmem:[%s1022 + $0x44] sm:$0xf]
        %v1041 = vld [vmem:[%s1022 + $0x48] sm:$0xf]
        %v1042 = vld [vmem:[%s1022 + $0x4c] sm:$0xf]
        %v1043 = vld [vmem:[%s1022 + $0x50] sm:$0xf]
        %v1044 = vld [vmem:[%s1022 + $0x54] sm:$0xf]
        %v1045 = vld [vmem:[%s1022 + $0x58] sm:$0xf]
        %v1046 = vld [vmem:[%s1022 + $0x5c] sm:$0xf]
        %v1047 = vld [vmem:[%s1022 + $0x60] sm:$0xf]
        %v1048 = vld [vmem:[%s1022 + $0x64] sm:$0xf]
        %v1049 = vld [vmem:[%s1022 + $0x68] sm:$0xf]
        %v1050 = vld [vmem:[%s1022 + $0x6c] sm:$0xf]
        %v1051 = vld [vmem:[%s1022 + $0x70] sm:$0xf]
        %v1052 = vld [vmem:[%s1022 + $0x74] sm:$0xf]
        %v1053 = vld [vmem:[%s1022 + $0x78] sm:$0xf]
        %v1054 = vld [vmem:[%s1022 + $0x7c] sm:$0xf]
        %s1055 = scalar_lea.vmem [#allocation7], 128
        %v1056 = vld [vmem:[%s1055] sm:$0xf]
        %v1057 = vld [vmem:[%s1055 + $0x4] sm:$0xf]
        %v1058 = vld [vmem:[%s1055 + $0x8] sm:$0xf]
        %v1059 = vld [vmem:[%s1055 + $0xc] sm:$0xf]
        %v1060 = vld [vmem:[%s1055 + $0x10] sm:$0xf]
        %v1061 = vld [vmem:[%s1055 + $0x14] sm:$0xf]
        %v1062 = vld [vmem:[%s1055 + $0x18] sm:$0xf]
        %v1063 = vld [vmem:[%s1055 + $0x1c] sm:$0xf]
        %v1064 = vld [vmem:[%s1055 + $0x20] sm:$0xf]
        %v1065 = vld [vmem:[%s1055 + $0x24] sm:$0xf]
        %v1066 = vld [vmem:[%s1055 + $0x28] sm:$0xf]
        %v1067 = vld [vmem:[%s1055 + $0x2c] sm:$0xf]
        %v1068 = vld [vmem:[%s1055 + $0x30] sm:$0xf]
        %v1069 = vld [vmem:[%s1055 + $0x34] sm:$0xf]
        %v1070 = vld [vmem:[%s1055 + $0x38] sm:$0xf]
        %v1071 = vld [vmem:[%s1055 + $0x3c] sm:$0xf]
        %v1072 = vld [vmem:[%s1055 + $0x40] sm:$0xf]
        %v1073 = vld [vmem:[%s1055 + $0x44] sm:$0xf]
        %v1074 = vld [vmem:[%s1055 + $0x48] sm:$0xf]
        %v1075 = vld [vmem:[%s1055 + $0x4c] sm:$0xf]
        %v1076 = vld [vmem:[%s1055 + $0x50] sm:$0xf]
        %v1077 = vld [vmem:[%s1055 + $0x54] sm:$0xf]
        %v1078 = vld [vmem:[%s1055 + $0x58] sm:$0xf]
        %v1079 = vld [vmem:[%s1055 + $0x5c] sm:$0xf]
        %v1080 = vld [vmem:[%s1055 + $0x60] sm:$0xf]
        %v1081 = vld [vmem:[%s1055 + $0x64] sm:$0xf]
        %v1082 = vld [vmem:[%s1055 + $0x68] sm:$0xf]
        %v1083 = vld [vmem:[%s1055 + $0x6c] sm:$0xf]
        %v1084 = vld [vmem:[%s1055 + $0x70] sm:$0xf]
        %v1085 = vld [vmem:[%s1055 + $0x74] sm:$0xf]
        %v1086 = vld [vmem:[%s1055 + $0x78] sm:$0xf]
        %v1087 = vld [vmem:[%s1055 + $0x7c] sm:$0xf]
        %s1088 = scalar_lea.vmem %s3, 1
        %v1089 = vld [vmem:[%s1088] sm:$0x1]
        %s1090 = scalar_lea.vmem %s5, 1
        %v1091 = vld [vmem:[%s1090] sm:$0x1]
        %v1092 = vld [vmem:[#allocation2] sm:$0xff]
        %v1093 = vld [vmem:[#allocation2 + $0x8] sm:$0xff]
        %v1094 = vld [vmem:[#allocation2 + $0x10] sm:$0xff]
        %v1095 = vld [vmem:[#allocation2 + $0x18] sm:$0xff]
        %v1096 = vpack.c.bf16 %v1094, %v1093
        %v1097 = vpack.c.bf16 %v1095, %v1095
        %v1098 = vpack.c.bf16 %v1093, %v1092
        %v1099 = vpack.c.bf16 %v1095, %v1094
        %vm1102 = vcmask 1042432
        %v1103 = vrot.slane %v1096, 5
        %v1104 = vrot.slane %v1097, 5
        %v1105 = vsel %vm1102, %v1103, %v1104
        %v1107 = vlaneseq
        %v1108 = vshrl.u32 %v1107, 7
        %v1109 = vsub.s32 0, %v1108
        %v1110 = vrot.slane %v1089, %v1109
        %vm1114 = vcmask 1044480
        %v1115 = vrot.slane %v1098, 3
        %v1116 = vrot.slane %v1099, 3
        %v1117 = vsel %vm1114, %v1115, %v1116
        %v1118 = vrot.slane %v1103, 3
        %v1119 = vrot.slane %v1105, 3
        %v1120 = vsel %vm1114, %v1118, %v1119
        %v1157 = vunpack.c.l.b16 %v1023
        %v1158 = vunpack.c.l.b16 %v1024
        %v1159 = vunpack.c.l.b16 %v1025
        %v1160 = vunpack.c.l.b16 %v1026
        %v1161 = vunpack.c.l.b16 %v1027
        %v1162 = vunpack.c.l.b16 %v1028
        %v1163 = vunpack.c.l.b16 %v1029
        %v1164 = vunpack.c.l.b16 %v1030
        %v1165 = vunpack.c.l.b16 %v1031
        %v1166 = vunpack.c.l.b16 %v1032
        %v1167 = vunpack.c.l.b16 %v1033
        %v1168 = vunpack.c.l.b16 %v1034
        %v1169 = vunpack.c.l.b16 %v1035
        %v1170 = vunpack.c.l.b16 %v1036
        %v1171 = vunpack.c.l.b16 %v1037
        %v1172 = vunpack.c.l.b16 %v1038
        %v1173 = vunpack.c.l.b16 %v1039
        %v1174 = vunpack.c.l.b16 %v1040
        %v1175 = vunpack.c.l.b16 %v1041
        %v1176 = vunpack.c.l.b16 %v1042
        %v1177 = vunpack.c.l.b16 %v1043
        %v1178 = vunpack.c.l.b16 %v1044
        %v1179 = vunpack.c.l.b16 %v1045
        %v1180 = vunpack.c.l.b16 %v1046
        %v1181 = vunpack.c.l.b16 %v1047
        %v1182 = vunpack.c.l.b16 %v1048
        %v1183 = vunpack.c.l.b16 %v1049
        %v1184 = vunpack.c.l.b16 %v1050
        %v1185 = vunpack.c.l.b16 %v1051
        %v1186 = vunpack.c.l.b16 %v1052
        %v1187 = vunpack.c.l.b16 %v1053
        %v1188 = vunpack.c.l.b16 %v1054
        %v1189 = vpack.c.b16 %v1158, %v1157
        %v1190 = vpack.c.b16 %v1160, %v1159
        %v1191 = vpack.c.b16 %v1162, %v1161
        %v1192 = vpack.c.b16 %v1164, %v1163
        %v1193 = vpack.c.b16 %v1166, %v1165
        %v1194 = vpack.c.b16 %v1168, %v1167
        %v1195 = vpack.c.b16 %v1170, %v1169
        %v1196 = vpack.c.b16 %v1172, %v1171
        %v1197 = vpack.c.b16 %v1174, %v1173
        %v1198 = vpack.c.b16 %v1176, %v1175
        %v1199 = vpack.c.b16 %v1178, %v1177
        %v1200 = vpack.c.b16 %v1180, %v1179
        %v1201 = vpack.c.b16 %v1182, %v1181
        %v1202 = vpack.c.b16 %v1184, %v1183
        %v1203 = vpack.c.b16 %v1186, %v1185
        %v1204 = vpack.c.b16 %v1188, %v1187
        %1221 = vmatprep.subr.bf16.mxu0 0
        %1222 = vmatpush1.bf16.msra.mxu0 %v1189
        %1223 = vmatprep.subr.bf16.mxu0 0
        %1224 = vmatpush1.bf16.msra.mxu0 %v1190
        %1225 = vmatprep.subr.bf16.mxu0 0
        %1226 = vmatpush1.bf16.msra.mxu0 %v1191
        %1227 = vmatprep.subr.bf16.mxu0 0
        %1228 = vmatpush1.bf16.msra.mxu0 %v1192
        %1229 = vmatprep.subr.bf16.mxu0 0
        %1230 = vmatpush1.bf16.msra.mxu0 %v1193
        %1231 = vmatprep.subr.bf16.mxu0 0
        %1232 = vmatpush1.bf16.msra.mxu0 %v1194
        %1233 = vmatprep.subr.bf16.mxu0 0
        %1234 = vmatpush1.bf16.msra.mxu0 %v1195
        %1235 = vmatprep.subr.bf16.mxu0 0
        %1236 = vmatpush1.bf16.msra.mxu0 %v1196
        %1237 = vmatprep.subr.bf16.mxu0 0
        %1238 = vmatpush1.bf16.msra.mxu0 %v1197
        %1239 = vmatprep.subr.bf16.mxu0 0
        %1240 = vmatpush1.bf16.msra.mxu0 %v1198
        %1241 = vmatprep.subr.bf16.mxu0 0
        %1242 = vmatpush1.bf16.msra.mxu0 %v1199
        %1243 = vmatprep.subr.bf16.mxu0 0
        %1244 = vmatpush1.bf16.msra.mxu0 %v1200
        %1245 = vmatprep.subr.bf16.mxu0 0
        %1246 = vmatpush1.bf16.msra.mxu0 %v1201
        %1247 = vmatprep.subr.bf16.mxu0 0
        %1248 = vmatpush1.bf16.msra.mxu0 %v1202
        %1249 = vmatprep.subr.bf16.mxu0 0
        %1250 = vmatpush1.bf16.msra.mxu0 %v1203
        %1251 = vmatprep.subr.bf16.mxu0 0
        %1252 = vmatpush1.bf16.msra.mxu0 %v1204
        %1253 = vmatprep.mubr.bf16.mxu0 %v1120
        %1254 = vmatmul.mubr.bf16.gmra.mrb[0].mxu0 %v1117
        %v1255 = vpop.f32.mrb[0].mxu0
        %v1256 = vadd.f32 %v1110, %v1255
        %v1257 = vpop.f32.mrb[0].mxu0
        %v1258 = vpop.f32.mrb[0].mxu0
        %v1259 = vadd.f32 %v1110, %v1258
        %v1260 = vpop.f32.mrb[0].mxu0
        %1261 = vmatprep.mubr.bf16.mxu0 %v1119
        %1262 = vmatmul.mubr.bf16.gmra.mrb[0].mxu0 %v1116
        %v1263 = vpop.f32.mrb[0].mxu0
        %v1264 = vadd.f32 %v1110, %v1263
        %v1265 = vpop.f32.mrb[0].mxu0
        %v1266 = vpop.f32.mrb[0].mxu0
        %v1267 = vpop.f32.mrb[0].mxu0
        %1268 = vdwg.mxu0
        %v1269 = vmax.f32 %v1256, 0.0
        %v1270 = vmax.f32 %v1259, 0.0
        %v1271 = vmax.f32 %v1264, 0.0
        %v1272 = vmul.f32 %v706, %v1269
        %v1273 = vmul.f32 %v711, %v1270
        %v1274 = vmul.f32 %v716, %v1271
        %vm1278 = vcmask 1041408
        %v1279 = vrot.slane %v1272, 6
        %v1280 = vrot.slane %v1273, 6
        %v1281 = vsel %vm1278, %v1279, %v1280
        %v1282 = vrot.slane %v1274, 6
        %v1283 = vsel %vm1278, %v1280, %v1282
        %v1287 = vsel %vm1278, 0.0, %v1279
        %v1288 = vpack.c.bf16 %v1281, %v1287
        %v1289 = vpack.c.bf16 %v1283, %v1283
        %v1290 = vpack.c.bf16 %v1273, %v1272
        %v1291 = vpack.c.bf16 %v1274, %v1274
        %v1293 = vlaneseq
        %v1294 = vshrl.u32 %v1293, 7
        %v1295 = vsub.s32 0, %v1294
        %v1296 = vrot.slane %v1091, %v1295
        %v1330 = vunpack.c.l.b16 %v1056
        %v1331 = vunpack.c.l.b16 %v1057
        %v1332 = vunpack.c.l.b16 %v1058
        %v1333 = vunpack.c.l.b16 %v1059
        %v1334 = vunpack.c.l.b16 %v1060
        %v1335 = vunpack.c.l.b16 %v1061
        %v1336 = vunpack.c.l.b16 %v1062
        %v1337 = vunpack.c.l.b16 %v1063
        %v1338 = vunpack.c.l.b16 %v1064
        %v1339 = vunpack.c.l.b16 %v1065
        %v1340 = vunpack.c.l.b16 %v1066
        %v1341 = vunpack.c.l.b16 %v1067
        %v1342 = vunpack.c.l.b16 %v1068
        %v1343 = vunpack.c.l.b16 %v1069
        %v1344 = vunpack.c.l.b16 %v1070
        %v1345 = vunpack.c.l.b16 %v1071
        %v1346 = vunpack.c.l.b16 %v1072
        %v1347 = vunpack.c.l.b16 %v1073
        %v1348 = vunpack.c.l.b16 %v1074
        %v1349 = vunpack.c.l.b16 %v1075
        %v1350 = vunpack.c.l.b16 %v1076
        %v1351 = vunpack.c.l.b16 %v1077
        %v1352 = vunpack.c.l.b16 %v1078
        %v1353 = vunpack.c.l.b16 %v1079
        %v1354 = vunpack.c.l.b16 %v1080
        %v1355 = vunpack.c.l.b16 %v1081
        %v1356 = vunpack.c.l.b16 %v1082
        %v1357 = vunpack.c.l.b16 %v1083
        %v1358 = vunpack.c.l.b16 %v1084
        %v1359 = vunpack.c.l.b16 %v1085
        %v1360 = vunpack.c.l.b16 %v1086
        %v1361 = vunpack.c.l.b16 %v1087
        %v1362 = vpack.c.b16 %v1331, %v1330
        %v1363 = vpack.c.b16 %v1333, %v1332
        %v1364 = vpack.c.b16 %v1335, %v1334
        %v1365 = vpack.c.b16 %v1337, %v1336
        %v1366 = vpack.c.b16 %v1339, %v1338
        %v1367 = vpack.c.b16 %v1341, %v1340
        %v1368 = vpack.c.b16 %v1343, %v1342
        %v1369 = vpack.c.b16 %v1345, %v1344
        %v1370 = vpack.c.b16 %v1347, %v1346
        %v1371 = vpack.c.b16 %v1349, %v1348
        %v1372 = vpack.c.b16 %v1351, %v1350
        %v1373 = vpack.c.b16 %v1353, %v1352
        %v1374 = vpack.c.b16 %v1355, %v1354
        %v1375 = vpack.c.b16 %v1357, %v1356
        %v1376 = vpack.c.b16 %v1359, %v1358
        %v1377 = vpack.c.b16 %v1361, %v1360
        %1394 = vmatprep.subr.bf16.mxu0 0
        %1395 = vmatpush1.bf16.msra.mxu0 %v1362
        %1396 = vmatprep.subr.bf16.mxu0 0
        %1397 = vmatpush1.bf16.msra.mxu0 %v1363
        %1398 = vmatprep.subr.bf16.mxu0 0
        %1399 = vmatpush1.bf16.msra.mxu0 %v1364
        %1400 = vmatprep.subr.bf16.mxu0 0
        %1401 = vmatpush1.bf16.msra.mxu0 %v1365
        %1402 = vmatprep.subr.bf16.mxu0 0
        %1403 = vmatpush1.bf16.msra.mxu0 %v1366
        %1404 = vmatprep.subr.bf16.mxu0 0
        %1405 = vmatpush1.bf16.msra.mxu0 %v1367
        %1406 = vmatprep.subr.bf16.mxu0 0
        %1407 = vmatpush1.bf16.msra.mxu0 %v1368
        %1408 = vmatprep.subr.bf16.mxu0 0
        %1409 = vmatpush1.bf16.msra.mxu0 %v1369
        %1410 = vmatprep.subr.bf16.mxu0 0
        %1411 = vmatpush1.bf16.msra.mxu0 %v1370
        %1412 = vmatprep.subr.bf16.mxu0 0
        %1413 = vmatpush1.bf16.msra.mxu0 %v1371
        %1414 = vmatprep.subr.bf16.mxu0 0
        %1415 = vmatpush1.bf16.msra.mxu0 %v1372
        %1416 = vmatprep.subr.bf16.mxu0 0
        %1417 = vmatpush1.bf16.msra.mxu0 %v1373
        %1418 = vmatprep.subr.bf16.mxu0 0
        %1419 = vmatpush1.bf16.msra.mxu0 %v1374
        %1420 = vmatprep.subr.bf16.mxu0 0
        %1421 = vmatpush1.bf16.msra.mxu0 %v1375
        %1422 = vmatprep.subr.bf16.mxu0 0
        %1423 = vmatpush1.bf16.msra.mxu0 %v1376
        %1424 = vmatprep.subr.bf16.mxu0 0
        %1425 = vmatpush1.bf16.msra.mxu0 %v1377
        %1426 = vmatprep.mubr.bf16.mxu0 %v1290
        %1427 = vmatmul.mubr.bf16.gmra.mrb[0].mxu0 %v1288
        %v1428 = vpop.f32.mrb[0].mxu0
        %v1429 = vadd.f32 %v1296, %v1428
        %v1430 = vpop.f32.mrb[0].mxu0
        %v1431 = vpop.f32.mrb[0].mxu0
        %v1432 = vadd.f32 %v1296, %v1431
        %v1433 = vpop.f32.mrb[0].mxu0
        %1434 = vmatprep.mubr.bf16.mxu0 %v1291
        %1435 = vmatmul.mubr.bf16.gmra.mrb[0].mxu0 %v1289
        %v1436 = vpop.f32.mrb[0].mxu0
        %v1437 = vadd.f32 %v1296, %v1436
        %v1438 = vpop.f32.mrb[0].mxu0
        %v1439 = vpop.f32.mrb[0].mxu0
        %v1440 = vpop.f32.mrb[0].mxu0
        %1441 = vdwg.mxu0
        %v1442 = vmax.f32 %v1429, 0.0
        %v1443 = vmax.f32 %v1432, 0.0
        %v1444 = vmax.f32 %v1437, 0.0
        %v1445 = vadd.f32 %v1442, %v1093
        %v1446 = vadd.f32 %v1443, %v1094
        %v1447 = vadd.f32 %v1444, %v1095
        %v1448 = vmax.f32 %v1445, 0.0
        %v1449 = vmax.f32 %v1446, 0.0
        %v1450 = vmax.f32 %v1447, 0.0
        %v1451 = vmul.f32 %v706, %v1448
        %v1452 = vmul.f32 %v711, %v1449
        %v1453 = vmul.f32 %v716, %v1450
        %1454 = vst [vmem:[#allocation2 + $0x8] sm:$0xff] %v1451
        %1455 = vst [vmem:[#allocation2 + $0x10] sm:$0xff] %v1452
        %1456 = vst [vmem:[#allocation2 + $0x18] sm:$0xff] %v1453
        %s1457 = scalar_lea.vmem [#allocation4], 256
        %v1458 = vld [vmem:[%s1457] sm:$0xf]
        %v1459 = vld [vmem:[%s1457 + $0x4] sm:$0xf]
        %v1460 = vld [vmem:[%s1457 + $0x8] sm:$0xf]
        %v1461 = vld [vmem:[%s1457 + $0xc] sm:$0xf]
        %v1462 = vld [vmem:[%s1457 + $0x10] sm:$0xf]
        %v1463 = vld [vmem:[%s1457 + $0x14] sm:$0xf]
        %v1464 = vld [vmem:[%s1457 + $0x18] sm:$0xf]
        %v1465 = vld [vmem:[%s1457 + $0x1c] sm:$0xf]
        %v1466 = vld [vmem:[%s1457 + $0x20] sm:$0xf]
        %v1467 = vld [vmem:[%s1457 + $0x24] sm:$0xf]
        %v1468 = vld [vmem:[%s1457 + $0x28] sm:$0xf]
        %v1469 = vld [vmem:[%s1457 + $0x2c] sm:$0xf]
        %v1470 = vld [vmem:[%s1457 + $0x30] sm:$0xf]
        %v1471 = vld [vmem:[%s1457 + $0x34] sm:$0xf]
        %v1472 = vld [vmem:[%s1457 + $0x38] sm:$0xf]
        %v1473 = vld [vmem:[%s1457 + $0x3c] sm:$0xf]
        %v1474 = vld [vmem:[%s1457 + $0x40] sm:$0xf]
        %v1475 = vld [vmem:[%s1457 + $0x44] sm:$0xf]
        %v1476 = vld [vmem:[%s1457 + $0x48] sm:$0xf]
        %v1477 = vld [vmem:[%s1457 + $0x4c] sm:$0xf]
        %v1478 = vld [vmem:[%s1457 + $0x50] sm:$0xf]
        %v1479 = vld [vmem:[%s1457 + $0x54] sm:$0xf]
        %v1480 = vld [vmem:[%s1457 + $0x58] sm:$0xf]
        %v1481 = vld [vmem:[%s1457 + $0x5c] sm:$0xf]
        %v1482 = vld [vmem:[%s1457 + $0x60] sm:$0xf]
        %v1483 = vld [vmem:[%s1457 + $0x64] sm:$0xf]
        %v1484 = vld [vmem:[%s1457 + $0x68] sm:$0xf]
        %v1485 = vld [vmem:[%s1457 + $0x6c] sm:$0xf]
        %v1486 = vld [vmem:[%s1457 + $0x70] sm:$0xf]
        %v1487 = vld [vmem:[%s1457 + $0x74] sm:$0xf]
        %v1488 = vld [vmem:[%s1457 + $0x78] sm:$0xf]
        %v1489 = vld [vmem:[%s1457 + $0x7c] sm:$0xf]
        %s1490 = scalar_lea.vmem [#allocation7], 256
        %v1491 = vld [vmem:[%s1490] sm:$0xf]
        %v1492 = vld [vmem:[%s1490 + $0x4] sm:$0xf]
        %v1493 = vld [vmem:[%s1490 + $0x8] sm:$0xf]
        %v1494 = vld [vmem:[%s1490 + $0xc] sm:$0xf]
        %v1495 = vld [vmem:[%s1490 + $0x10] sm:$0xf]
        %v1496 = vld [vmem:[%s1490 + $0x14] sm:$0xf]
        %v1497 = vld [vmem:[%s1490 + $0x18] sm:$0xf]
        %v1498 = vld [vmem:[%s1490 + $0x1c] sm:$0xf]
        %v1499 = vld [vmem:[%s1490 + $0x20] sm:$0xf]
        %v1500 = vld [vmem:[%s1490 + $0x24] sm:$0xf]
        %v1501 = vld [vmem:[%s1490 + $0x28] sm:$0xf]
        %v1502 = vld [vmem:[%s1490 + $0x2c] sm:$0xf]
        %v1503 = vld [vmem:[%s1490 + $0x30] sm:$0xf]
        %v1504 = vld [vmem:[%s1490 + $0x34] sm:$0xf]
        %v1505 = vld [vmem:[%s1490 + $0x38] sm:$0xf]
        %v1506 = vld [vmem:[%s1490 + $0x3c] sm:$0xf]
        %v1507 = vld [vmem:[%s1490 + $0x40] sm:$0xf]
        %v1508 = vld [vmem:[%s1490 + $0x44] sm:$0xf]
        %v1509 = vld [vmem:[%s1490 + $0x48] sm:$0xf]
        %v1510 = vld [vmem:[%s1490 + $0x4c] sm:$0xf]
        %v1511 = vld [vmem:[%s1490 + $0x50] sm:$0xf]
        %v1512 = vld [vmem:[%s1490 + $0x54] sm:$0xf]
        %v1513 = vld [vmem:[%s1490 + $0x58] sm:$0xf]
        %v1514 = vld [vmem:[%s1490 + $0x5c] sm:$0xf]
        %v1515 = vld [vmem:[%s1490 + $0x60] sm:$0xf]
        %v1516 = vld [vmem:[%s1490 + $0x64] sm:$0xf]
        %v1517 = vld [vmem:[%s1490 + $0x68] sm:$0xf]
        %v1518 = vld [vmem:[%s1490 + $0x6c] sm:$0xf]
        %v1519 = vld [vmem:[%s1490 + $0x70] sm:$0xf]
        %v1520 = vld [vmem:[%s1490 + $0x74] sm:$0xf]
        %v1521 = vld [vmem:[%s1490 + $0x78] sm:$0xf]
        %v1522 = vld [vmem:[%s1490 + $0x7c] sm:$0xf]
        %s1523 = scalar_lea.vmem %s3, 2
        %v1524 = vld [vmem:[%s1523] sm:$0x1]
        %s1525 = scalar_lea.vmem %s5, 2
        %v1526 = vld [vmem:[%s1525] sm:$0x1]
        %v1527 = vld [vmem:[#allocation2] sm:$0xff]
        %v1528 = vld [vmem:[#allocation2 + $0x8] sm:$0xff]
        %v1529 = vld [vmem:[#allocation2 + $0x10] sm:$0xff]
        %v1530 = vld [vmem:[#allocation2 + $0x18] sm:$0xff]
        %v1531 = vpack.c.bf16 %v1529, %v1528
        %v1532 = vpack.c.bf16 %v1530, %v1530
        %v1533 = vpack.c.bf16 %v1528, %v1527
        %v1534 = vpack.c.bf16 %v1530, %v1529
        %vm1537 = vcmask 1041408
        %v1538 = vrot.slane %v1531, 6
        %v1539 = vrot.slane %v1532, 6
        %v1540 = vsel %vm1537, %v1538, %v1539
        %v1542 = vlaneseq
        %v1543 = vshrl.u32 %v1542, 7
        %v1544 = vsub.s32 0, %v1543
        %v1545 = vrot.slane %v1524, %v1544
        %vm1549 = vcmask 1045504
        %v1550 = vrot.slane %v1533, 2
        %v1551 = vrot.slane %v1534, 2
        %v1552 = vsel %vm1549, %v1550, %v1551
        %v1553 = vrot.slane %v1538, 2
        %v1554 = vrot.slane %v1540, 2
        %v1555 = vsel %vm1549, %v1553, %v1554
        %v1592 = vunpack.c.l.b16 %v1458
        %v1593 = vunpack.c.l.b16 %v1459
        %v1594 = vunpack.c.l.b16 %v1460
        %v1595 = vunpack.c.l.b16 %v1461
        %v1596 = vunpack.c.l.b16 %v1462
        %v1597 = vunpack.c.l.b16 %v1463
        %v1598 = vunpack.c.l.b16 %v1464
        %v1599 = vunpack.c.l.b16 %v1465
        %v1600 = vunpack.c.l.b16 %v1466
        %v1601 = vunpack.c.l.b16 %v1467
        %v1602 = vunpack.c.l.b16 %v1468
        %v1603 = vunpack.c.l.b16 %v1469
        %v1604 = vunpack.c.l.b16 %v1470
        %v1605 = vunpack.c.l.b16 %v1471
        %v1606 = vunpack.c.l.b16 %v1472
        %v1607 = vunpack.c.l.b16 %v1473
        %v1608 = vunpack.c.l.b16 %v1474
        %v1609 = vunpack.c.l.b16 %v1475
        %v1610 = vunpack.c.l.b16 %v1476
        %v1611 = vunpack.c.l.b16 %v1477
        %v1612 = vunpack.c.l.b16 %v1478
        %v1613 = vunpack.c.l.b16 %v1479
        %v1614 = vunpack.c.l.b16 %v1480
        %v1615 = vunpack.c.l.b16 %v1481
        %v1616 = vunpack.c.l.b16 %v1482
        %v1617 = vunpack.c.l.b16 %v1483
        %v1618 = vunpack.c.l.b16 %v1484
        %v1619 = vunpack.c.l.b16 %v1485
        %v1620 = vunpack.c.l.b16 %v1486
        %v1621 = vunpack.c.l.b16 %v1487
        %v1622 = vunpack.c.l.b16 %v1488
        %v1623 = vunpack.c.l.b16 %v1489
        %v1624 = vpack.c.b16 %v1593, %v1592
        %v1625 = vpack.c.b16 %v1595, %v1594
        %v1626 = vpack.c.b16 %v1597, %v1596
        %v1627 = vpack.c.b16 %v1599, %v1598
        %v1628 = vpack.c.b16 %v1601, %v1600
        %v1629 = vpack.c.b16 %v1603, %v1602
        %v1630 = vpack.c.b16 %v1605, %v1604
        %v1631 = vpack.c.b16 %v1607, %v1606
        %v1632 = vpack.c.b16 %v1609, %v1608
        %v1633 = vpack.c.b16 %v1611, %v1610
        %v1634 = vpack.c.b16 %v1613, %v1612
        %v1635 = vpack.c.b16 %v1615, %v1614
        %v1636 = vpack.c.b16 %v1617, %v1616
        %v1637 = vpack.c.b16 %v1619, %v1618
        %v1638 = vpack.c.b16 %v1621, %v1620
        %v1639 = vpack.c.b16 %v1623, %v1622
        %1656 = vmatprep.subr.bf16.mxu0 0
        %1657 = vmatpush1.bf16.msra.mxu0 %v1624
        %1658 = vmatprep.subr.bf16.mxu0 0
        %1659 = vmatpush1.bf16.msra.mxu0 %v1625
        %1660 = vmatprep.subr.bf16.mxu0 0
        %1661 = vmatpush1.bf16.msra.mxu0 %v1626
        %1662 = vmatprep.subr.bf16.mxu0 0
        %1663 = vmatpush1.bf16.msra.mxu0 %v1627
        %1664 = vmatprep.subr.bf16.mxu0 0
        %1665 = vmatpush1.bf16.msra.mxu0 %v1628
        %1666 = vmatprep.subr.bf16.mxu0 0
        %1667 = vmatpush1.bf16.msra.mxu0 %v1629
        %1668 = vmatprep.subr.bf16.mxu0 0
        %1669 = vmatpush1.bf16.msra.mxu0 %v1630
        %1670 = vmatprep.subr.bf16.mxu0 0
        %1671 = vmatpush1.bf16.msra.mxu0 %v1631
        %1672 = vmatprep.subr.bf16.mxu0 0
        %1673 = vmatpush1.bf16.msra.mxu0 %v1632
        %1674 = vmatprep.subr.bf16.mxu0 0
        %1675 = vmatpush1.bf16.msra.mxu0 %v1633
        %1676 = vmatprep.subr.bf16.mxu0 0
        %1677 = vmatpush1.bf16.msra.mxu0 %v1634
        %1678 = vmatprep.subr.bf16.mxu0 0
        %1679 = vmatpush1.bf16.msra.mxu0 %v1635
        %1680 = vmatprep.subr.bf16.mxu0 0
        %1681 = vmatpush1.bf16.msra.mxu0 %v1636
        %1682 = vmatprep.subr.bf16.mxu0 0
        %1683 = vmatpush1.bf16.msra.mxu0 %v1637
        %1684 = vmatprep.subr.bf16.mxu0 0
        %1685 = vmatpush1.bf16.msra.mxu0 %v1638
        %1686 = vmatprep.subr.bf16.mxu0 0
        %1687 = vmatpush1.bf16.msra.mxu0 %v1639
        %1688 = vmatprep.mubr.bf16.mxu0 %v1555
        %1689 = vmatmul.mubr.bf16.gmra.mrb[0].mxu0 %v1552
        %v1690 = vpop.f32.mrb[0].mxu0
        %v1691 = vadd.f32 %v1545, %v1690
        %v1692 = vpop.f32.mrb[0].mxu0
        %v1693 = vpop.f32.mrb[0].mxu0
        %v1694 = vadd.f32 %v1545, %v1693
        %v1695 = vpop.f32.mrb[0].mxu0
        %1696 = vmatprep.mubr.bf16.mxu0 %v1554
        %1697 = vmatmul.mubr.bf16.gmra.mrb[0].mxu0 %v1551
        %v1698 = vpop.f32.mrb[0].mxu0
        %v1699 = vadd.f32 %v1545, %v1698
        %v1700 = vpop.f32.mrb[0].mxu0
        %v1701 = vpop.f32.mrb[0].mxu0
        %v1702 = vpop.f32.mrb[0].mxu0
        %1703 = vdwg.mxu0
        %v1704 = vmax.f32 %v1691, 0.0
        %v1705 = vmax.f32 %v1694, 0.0
        %v1706 = vmax.f32 %v1699, 0.0
        %v1707 = vmul.f32 %v706, %v1704
        %v1708 = vmul.f32 %v711, %v1705
        %v1709 = vmul.f32 %v716, %v1706
        %vm1713 = vcmask 1043456
        %v1714 = vrot.slane %v1707, 4
        %v1715 = vrot.slane %v1708, 4
        %v1716 = vsel %vm1713, %v1714, %v1715
        %v1717 = vrot.slane %v1709, 4
        %v1718 = vsel %vm1713, %v1715, %v1717
        %v1722 = vsel %vm1713, 0.0, %v1714
        %v1723 = vpack.c.bf16 %v1716, %v1722
        %v1724 = vpack.c.bf16 %v1718, %v1718
        %v1725 = vpack.c.bf16 %v1708, %v1707
        %v1726 = vpack.c.bf16 %v1709, %v1709
        %v1728 = vlaneseq
        %v1729 = vshrl.u32 %v1728, 7
        %v1730 = vsub.s32 0, %v1729
        %v1731 = vrot.slane %v1526, %v1730
        %v1765 = vunpack.c.l.b16 %v1491
        %v1766 = vunpack.c.l.b16 %v1492
        %v1767 = vunpack.c.l.b16 %v1493
        %v1768 = vunpack.c.l.b16 %v1494
        %v1769 = vunpack.c.l.b16 %v1495
        %v1770 = vunpack.c.l.b16 %v1496
        %v1771 = vunpack.c.l.b16 %v1497
        %v1772 = vunpack.c.l.b16 %v1498
        %v1773 = vunpack.c.l.b16 %v1499
        %v1774 = vunpack.c.l.b16 %v1500
        %v1775 = vunpack.c.l.b16 %v1501
        %v1776 = vunpack.c.l.b16 %v1502
        %v1777 = vunpack.c.l.b16 %v1503
        %v1778 = vunpack.c.l.b16 %v1504
        %v1779 = vunpack.c.l.b16 %v1505
        %v1780 = vunpack.c.l.b16 %v1506
        %v1781 = vunpack.c.l.b16 %v1507
        %v1782 = vunpack.c.l.b16 %v1508
        %v1783 = vunpack.c.l.b16 %v1509
        %v1784 = vunpack.c.l.b16 %v1510
        %v1785 = vunpack.c.l.b16 %v1511
        %v1786 = vunpack.c.l.b16 %v1512
        %v1787 = vunpack.c.l.b16 %v1513
        %v1788 = vunpack.c.l.b16 %v1514
        %v1789 = vunpack.c.l.b16 %v1515
        %v1790 = vunpack.c.l.b16 %v1516
        %v1791 = vunpack.c.l.b16 %v1517
        %v1792 = vunpack.c.l.b16 %v1518
        %v1793 = vunpack.c.l.b16 %v1519
        %v1794 = vunpack.c.l.b16 %v1520
        %v1795 = vunpack.c.l.b16 %v1521
        %v1796 = vunpack.c.l.b16 %v1522
        %v1797 = vpack.c.b16 %v1766, %v1765
        %v1798 = vpack.c.b16 %v1768, %v1767
        %v1799 = vpack.c.b16 %v1770, %v1769
        %v1800 = vpack.c.b16 %v1772, %v1771
        %v1801 = vpack.c.b16 %v1774, %v1773
        %v1802 = vpack.c.b16 %v1776, %v1775
        %v1803 = vpack.c.b16 %v1778, %v1777
        %v1804 = vpack.c.b16 %v1780, %v1779
        %v1805 = vpack.c.b16 %v1782, %v1781
        %v1806 = vpack.c.b16 %v1784, %v1783
        %v1807 = vpack.c.b16 %v1786, %v1785
        %v1808 = vpack.c.b16 %v1788, %v1787
        %v1809 = vpack.c.b16 %v1790, %v1789
        %v1810 = vpack.c.b16 %v1792, %v1791
        %v1811 = vpack.c.b16 %v1794, %v1793
        %v1812 = vpack.c.b16 %v1796, %v1795
        %1829 = vmatprep.subr.bf16.mxu0 0
        %1830 = vmatpush1.bf16.msra.mxu0 %v1797
        %1831 = vmatprep.subr.bf16.mxu0 0
        %1832 = vmatpush1.bf16.msra.mxu0 %v1798
        %1833 = vmatprep.subr.bf16.mxu0 0
        %1834 = vmatpush1.bf16.msra.mxu0 %v1799
        %1835 = vmatprep.subr.bf16.mxu0 0
        %1836 = vmatpush1.bf16.msra.mxu0 %v1800
        %1837 = vmatprep.subr.bf16.mxu0 0
        %1838 = vmatpush1.bf16.msra.mxu0 %v1801
        %1839 = vmatprep.subr.bf16.mxu0 0
        %1840 = vmatpush1.bf16.msra.mxu0 %v1802
        %1841 = vmatprep.subr.bf16.mxu0 0
        %1842 = vmatpush1.bf16.msra.mxu0 %v1803
        %1843 = vmatprep.subr.bf16.mxu0 0
        %1844 = vmatpush1.bf16.msra.mxu0 %v1804
        %1845 = vmatprep.subr.bf16.mxu0 0
        %1846 = vmatpush1.bf16.msra.mxu0 %v1805
        %1847 = vmatprep.subr.bf16.mxu0 0
        %1848 = vmatpush1.bf16.msra.mxu0 %v1806
        %1849 = vmatprep.subr.bf16.mxu0 0
        %1850 = vmatpush1.bf16.msra.mxu0 %v1807
        %1851 = vmatprep.subr.bf16.mxu0 0
        %1852 = vmatpush1.bf16.msra.mxu0 %v1808
        %1853 = vmatprep.subr.bf16.mxu0 0
        %1854 = vmatpush1.bf16.msra.mxu0 %v1809
        %1855 = vmatprep.subr.bf16.mxu0 0
        %1856 = vmatpush1.bf16.msra.mxu0 %v1810
        %1857 = vmatprep.subr.bf16.mxu0 0
        %1858 = vmatpush1.bf16.msra.mxu0 %v1811
        %1859 = vmatprep.subr.bf16.mxu0 0
        %1860 = vmatpush1.bf16.msra.mxu0 %v1812
        %1861 = vmatprep.mubr.bf16.mxu0 %v1725
        %1862 = vmatmul.mubr.bf16.gmra.mrb[0].mxu0 %v1723
        %v1863 = vpop.f32.mrb[0].mxu0
        %v1864 = vadd.f32 %v1731, %v1863
        %v1865 = vpop.f32.mrb[0].mxu0
        %v1866 = vpop.f32.mrb[0].mxu0
        %v1867 = vadd.f32 %v1731, %v1866
        %v1868 = vpop.f32.mrb[0].mxu0
        %1869 = vmatprep.mubr.bf16.mxu0 %v1726
        %1870 = vmatmul.mubr.bf16.gmra.mrb[0].mxu0 %v1724
        %v1871 = vpop.f32.mrb[0].mxu0
        %v1872 = vadd.f32 %v1731, %v1871
        %v1873 = vpop.f32.mrb[0].mxu0
        %v1874 = vpop.f32.mrb[0].mxu0
        %v1875 = vpop.f32.mrb[0].mxu0
        %1876 = vdwg.mxu0
        %v1877 = vmax.f32 %v1864, 0.0
        %v1878 = vmax.f32 %v1867, 0.0
        %v1879 = vmax.f32 %v1872, 0.0
        %v1880 = vadd.f32 %v1877, %v1528
        %v1881 = vadd.f32 %v1878, %v1529
        %v1882 = vadd.f32 %v1879, %v1530
        %v1883 = vmax.f32 %v1880, 0.0
        %v1884 = vmax.f32 %v1881, 0.0
        %v1885 = vmax.f32 %v1882, 0.0
        %v1886 = vmul.f32 %v706, %v1883
        %v1887 = vmul.f32 %v711, %v1884
        %v1888 = vmul.f32 %v716, %v1885
        %1889 = vst [vmem:[#allocation2 + $0x8] sm:$0xff] %v1886
        %1890 = vst [vmem:[#allocation2 + $0x10] sm:$0xff] %v1887
        %1891 = vst [vmem:[#allocation2 + $0x18] sm:$0xff] %v1888
        %s1892 = scalar_lea.vmem [#allocation4], 384
        %v1893 = vld [vmem:[%s1892] sm:$0xf]
        %v1894 = vld [vmem:[%s1892 + $0x4] sm:$0xf]
        %v1895 = vld [vmem:[%s1892 + $0x8] sm:$0xf]
        %v1896 = vld [vmem:[%s1892 + $0xc] sm:$0xf]
        %v1897 = vld [vmem:[%s1892 + $0x10] sm:$0xf]
        %v1898 = vld [vmem:[%s1892 + $0x14] sm:$0xf]
        %v1899 = vld [vmem:[%s1892 + $0x18] sm:$0xf]
        %v1900 = vld [vmem:[%s1892 + $0x1c] sm:$0xf]
        %v1901 = vld [vmem:[%s1892 + $0x20] sm:$0xf]
        %v1902 = vld [vmem:[%s1892 + $0x24] sm:$0xf]
        %v1903 = vld [vmem:[%s1892 + $0x28] sm:$0xf]
        %v1904 = vld [vmem:[%s1892 + $0x2c] sm:$0xf]
        %v1905 = vld [vmem:[%s1892 + $0x30] sm:$0xf]
        %v1906 = vld [vmem:[%s1892 + $0x34] sm:$0xf]
        %v1907 = vld [vmem:[%s1892 + $0x38] sm:$0xf]
        %v1908 = vld [vmem:[%s1892 + $0x3c] sm:$0xf]
        %v1909 = vld [vmem:[%s1892 + $0x40] sm:$0xf]
        %v1910 = vld [vmem:[%s1892 + $0x44] sm:$0xf]
        %v1911 = vld [vmem:[%s1892 + $0x48] sm:$0xf]
        %v1912 = vld [vmem:[%s1892 + $0x4c] sm:$0xf]
        %v1913 = vld [vmem:[%s1892 + $0x50] sm:$0xf]
        %v1914 = vld [vmem:[%s1892 + $0x54] sm:$0xf]
        %v1915 = vld [vmem:[%s1892 + $0x58] sm:$0xf]
        %v1916 = vld [vmem:[%s1892 + $0x5c] sm:$0xf]
        %v1917 = vld [vmem:[%s1892 + $0x60] sm:$0xf]
        %v1918 = vld [vmem:[%s1892 + $0x64] sm:$0xf]
        %v1919 = vld [vmem:[%s1892 + $0x68] sm:$0xf]
        %v1920 = vld [vmem:[%s1892 + $0x6c] sm:$0xf]
        %v1921 = vld [vmem:[%s1892 + $0x70] sm:$0xf]
        %v1922 = vld [vmem:[%s1892 + $0x74] sm:$0xf]
        %v1923 = vld [vmem:[%s1892 + $0x78] sm:$0xf]
        %v1924 = vld [vmem:[%s1892 + $0x7c] sm:$0xf]
        %s1925 = scalar_lea.vmem [#allocation7], 384
        %v1926 = vld [vmem:[%s1925] sm:$0xf]
        %v1927 = vld [vmem:[%s1925 + $0x4] sm:$0xf]
        %v1928 = vld [vmem:[%s1925 + $0x8] sm:$0xf]
        %v1929 = vld [vmem:[%s1925 + $0xc] sm:$0xf]
        %v1930 = vld [vmem:[%s1925 + $0x10] sm:$0xf]
        %v1931 = vld [vmem:[%s1925 + $0x14] sm:$0xf]
        %v1932 = vld [vmem:[%s1925 + $0x18] sm:$0xf]
        %v1933 = vld [vmem:[%s1925 + $0x1c] sm:$0xf]
        %v1934 = vld [vmem:[%s1925 + $0x20] sm:$0xf]
        %v1935 = vld [vmem:[%s1925 + $0x24] sm:$0xf]
        %v1936 = vld [vmem:[%s1925 + $0x28] sm:$0xf]
        %v1937 = vld [vmem:[%s1925 + $0x2c] sm:$0xf]
        %v1938 = vld [vmem:[%s1925 + $0x30] sm:$0xf]
        %v1939 = vld [vmem:[%s1925 + $0x34] sm:$0xf]
        %v1940 = vld [vmem:[%s1925 + $0x38] sm:$0xf]
        %v1941 = vld [vmem:[%s1925 + $0x3c] sm:$0xf]
        %v1942 = vld [vmem:[%s1925 + $0x40] sm:$0xf]
        %v1943 = vld [vmem:[%s1925 + $0x44] sm:$0xf]
        %v1944 = vld [vmem:[%s1925 + $0x48] sm:$0xf]
        %v1945 = vld [vmem:[%s1925 + $0x4c] sm:$0xf]
        %v1946 = vld [vmem:[%s1925 + $0x50] sm:$0xf]
        %v1947 = vld [vmem:[%s1925 + $0x54] sm:$0xf]
        %v1948 = vld [vmem:[%s1925 + $0x58] sm:$0xf]
        %v1949 = vld [vmem:[%s1925 + $0x5c] sm:$0xf]
        %v1950 = vld [vmem:[%s1925 + $0x60] sm:$0xf]
        %v1951 = vld [vmem:[%s1925 + $0x64] sm:$0xf]
        %v1952 = vld [vmem:[%s1925 + $0x68] sm:$0xf]
        %v1953 = vld [vmem:[%s1925 + $0x6c] sm:$0xf]
        %v1954 = vld [vmem:[%s1925 + $0x70] sm:$0xf]
        %v1955 = vld [vmem:[%s1925 + $0x74] sm:$0xf]
        %v1956 = vld [vmem:[%s1925 + $0x78] sm:$0xf]
        %v1957 = vld [vmem:[%s1925 + $0x7c] sm:$0xf]
        %s1958 = scalar_lea.vmem %s3, 3
        %v1959 = vld [vmem:[%s1958] sm:$0x1]
        %s1960 = scalar_lea.vmem %s5, 3
        %v1961 = vld [vmem:[%s1960] sm:$0x1]
        %v1962 = vld [vmem:[#allocation2] sm:$0xff]
        %v1963 = vld [vmem:[#allocation2 + $0x8] sm:$0xff]
        %v1964 = vld [vmem:[#allocation2 + $0x10] sm:$0xff]
        %v1965 = vld [vmem:[#allocation2 + $0x18] sm:$0xff]
        %v1966 = vpack.c.bf16 %v1964, %v1963
        %v1967 = vpack.c.bf16 %v1965, %v1965
        %v1968 = vpack.c.bf16 %v1963, %v1962
        %v1969 = vpack.c.bf16 %v1964, %v1964
        %v1971 = vlaneseq
        %v1972 = vshrl.u32 %v1971, 7
        %v1973 = vsub.s32 0, %v1972
        %v1974 = vrot.slane %v1959, %v1973
        %v2008 = vunpack.c.l.b16 %v1893
        %v2009 = vunpack.c.l.b16 %v1894
        %v2010 = vunpack.c.l.b16 %v1895
        %v2011 = vunpack.c.l.b16 %v1896
        %v2012 = vunpack.c.l.b16 %v1897
        %v2013 = vunpack.c.l.b16 %v1898
        %v2014 = vunpack.c.l.b16 %v1899
        %v2015 = vunpack.c.l.b16 %v1900
        %v2016 = vunpack.c.l.b16 %v1901
        %v2017 = vunpack.c.l.b16 %v1902
        %v2018 = vunpack.c.l.b16 %v1903
        %v2019 = vunpack.c.l.b16 %v1904
        %v2020 = vunpack.c.l.b16 %v1905
        %v2021 = vunpack.c.l.b16 %v1906
        %v2022 = vunpack.c.l.b16 %v1907
        %v2023 = vunpack.c.l.b16 %v1908
        %v2024 = vunpack.c.l.b16 %v1909
        %v2025 = vunpack.c.l.b16 %v1910
        %v2026 = vunpack.c.l.b16 %v1911
        %v2027 = vunpack.c.l.b16 %v1912
        %v2028 = vunpack.c.l.b16 %v1913
        %v2029 = vunpack.c.l.b16 %v1914
        %v2030 = vunpack.c.l.b16 %v1915
        %v2031 = vunpack.c.l.b16 %v1916
        %v2032 = vunpack.c.l.b16 %v1917
        %v2033 = vunpack.c.l.b16 %v1918
        %v2034 = vunpack.c.l.b16 %v1919
        %v2035 = vunpack.c.l.b16 %v1920
        %v2036 = vunpack.c.l.b16 %v1921
        %v2037 = vunpack.c.l.b16 %v1922
        %v2038 = vunpack.c.l.b16 %v1923
        %v2039 = vunpack.c.l.b16 %v1924
        %v2040 = vpack.c.b16 %v2009, %v2008
        %v2041 = vpack.c.b16 %v2011, %v2010
        %v2042 = vpack.c.b16 %v2013, %v2012
        %v2043 = vpack.c.b16 %v2015, %v2014
        %v2044 = vpack.c.b16 %v2017, %v2016
        %v2045 = vpack.c.b16 %v2019, %v2018
        %v2046 = vpack.c.b16 %v2021, %v2020
        %v2047 = vpack.c.b16 %v2023, %v2022
        %v2048 = vpack.c.b16 %v2025, %v2024
        %v2049 = vpack.c.b16 %v2027, %v2026
        %v2050 = vpack.c.b16 %v2029, %v2028
        %v2051 = vpack.c.b16 %v2031, %v2030
        %v2052 = vpack.c.b16 %v2033, %v2032
        %v2053 = vpack.c.b16 %v2035, %v2034
        %v2054 = vpack.c.b16 %v2037, %v2036
        %v2055 = vpack.c.b16 %v2039, %v2038
        %2072 = vmatprep.subr.bf16.mxu0 0
        %2073 = vmatpush1.bf16.msra.mxu0 %v2040
        %2074 = vmatprep.subr.bf16.mxu0 0
        %2075 = vmatpush1.bf16.msra.mxu0 %v2041
        %2076 = vmatprep.subr.bf16.mxu0 0
        %2077 = vmatpush1.bf16.msra.mxu0 %v2042
        %2078 = vmatprep.subr.bf16.mxu0 0
        %2079 = vmatpush1.bf16.msra.mxu0 %v2043
        %2080 = vmatprep.subr.bf16.mxu0 0
        %2081 = vmatpush1.bf16.msra.mxu0 %v2044
        %2082 = vmatprep.subr.bf16.mxu0 0
        %2083 = vmatpush1.bf16.msra.mxu0 %v2045
        %2084 = vmatprep.subr.bf16.mxu0 0
        %2085 = vmatpush1.bf16.msra.mxu0 %v2046
        %2086 = vmatprep.subr.bf16.mxu0 0
        %2087 = vmatpush1.bf16.msra.mxu0 %v2047
        %2088 = vmatprep.subr.bf16.mxu0 0
        %2089 = vmatpush1.bf16.msra.mxu0 %v2048
        %2090 = vmatprep.subr.bf16.mxu0 0
        %2091 = vmatpush1.bf16.msra.mxu0 %v2049
        %2092 = vmatprep.subr.bf16.mxu0 0
        %2093 = vmatpush1.bf16.msra.mxu0 %v2050
        %2094 = vmatprep.subr.bf16.mxu0 0
        %2095 = vmatpush1.bf16.msra.mxu0 %v2051
        %2096 = vmatprep.subr.bf16.mxu0 0
        %2097 = vmatpush1.bf16.msra.mxu0 %v2052
        %2098 = vmatprep.subr.bf16.mxu0 0
        %2099 = vmatpush1.bf16.msra.mxu0 %v2053
        %2100 = vmatprep.subr.bf16.mxu0 0
        %2101 = vmatpush1.bf16.msra.mxu0 %v2054
        %2102 = vmatprep.subr.bf16.mxu0 0
        %2103 = vmatpush1.bf16.msra.mxu0 %v2055
        %2104 = vmatprep.mubr.bf16.mxu0 %v1966
        %2105 = vmatmul.mubr.bf16.gmra.mrb[0].mxu0 %v1968
        %v2106 = vpop.f32.mrb[0].mxu0
        %v2107 = vadd.f32 %v1974, %v2106
        %v2108 = vpop.f32.mrb[0].mxu0
        %v2109 = vpop.f32.mrb[0].mxu0
        %v2110 = vadd.f32 %v1974, %v2109
        %v2111 = vpop.f32.mrb[0].mxu0
        %2112 = vmatprep.mubr.bf16.mxu0 %v1967
        %2113 = vmatmul.mubr.bf16.gmra.mrb[0].mxu0 %v1969
        %v2114 = vpop.f32.mrb[0].mxu0
        %v2115 = vadd.f32 %v1974, %v2114
        %v2116 = vpop.f32.mrb[0].mxu0
        %v2117 = vpop.f32.mrb[0].mxu0
        %v2118 = vpop.f32.mrb[0].mxu0
        %2119 = vdwg.mxu0
        %v2120 = vmax.f32 %v2107, 0.0
        %v2121 = vmax.f32 %v2110, 0.0
        %v2122 = vmax.f32 %v2115, 0.0
        %v2123 = vmul.f32 %v706, %v2120
        %v2124 = vmul.f32 %v711, %v2121
        %v2125 = vmul.f32 %v716, %v2122
        %v2126 = vpack.c.bf16 %v2123, 0.0
        %v2127 = vpack.c.bf16 %v2124, %v2124
        %v2128 = vpack.c.bf16 %v2124, %v2123
        %v2129 = vpack.c.bf16 %v2125, %v2125
        %v2131 = vlaneseq
        %v2132 = vshrl.u32 %v2131, 7
        %v2133 = vsub.s32 0, %v2132
        %v2134 = vrot.slane %v1961, %v2133
        %v2168 = vunpack.c.l.b16 %v1926
        %v2169 = vunpack.c.l.b16 %v1927
        %v2170 = vunpack.c.l.b16 %v1928
        %v2171 = vunpack.c.l.b16 %v1929
        %v2172 = vunpack.c.l.b16 %v1930
        %v2173 = vunpack.c.l.b16 %v1931
        %v2174 = vunpack.c.l.b16 %v1932
        %v2175 = vunpack.c.l.b16 %v1933
        %v2176 = vunpack.c.l.b16 %v1934
        %v2177 = vunpack.c.l.b16 %v1935
        %v2178 = vunpack.c.l.b16 %v1936
        %v2179 = vunpack.c.l.b16 %v1937
        %v2180 = vunpack.c.l.b16 %v1938
        %v2181 = vunpack.c.l.b16 %v1939
        %v2182 = vunpack.c.l.b16 %v1940
        %v2183 = vunpack.c.l.b16 %v1941
        %v2184 = vunpack.c.l.b16 %v1942
        %v2185 = vunpack.c.l.b16 %v1943
        %v2186 = vunpack.c.l.b16 %v1944
        %v2187 = vunpack.c.l.b16 %v1945
        %v2188 = vunpack.c.l.b16 %v1946
        %v2189 = vunpack.c.l.b16 %v1947
        %v2190 = vunpack.c.l.b16 %v1948
        %v2191 = vunpack.c.l.b16 %v1949
        %v2192 = vunpack.c.l.b16 %v1950
        %v2193 = vunpack.c.l.b16 %v1951
        %v2194 = vunpack.c.l.b16 %v1952
        %v2195 = vunpack.c.l.b16 %v1953
        %v2196 = vunpack.c.l.b16 %v1954
        %v2197 = vunpack.c.l.b16 %v1955
        %v2198 = vunpack.c.l.b16 %v1956
        %v2199 = vunpack.c.l.b16 %v1957
        %v2200 = vpack.c.b16 %v2169, %v2168
        %v2201 = vpack.c.b16 %v2171, %v2170
        %v2202 = vpack.c.b16 %v2173, %v2172
        %v2203 = vpack.c.b16 %v2175, %v2174
        %v2204 = vpack.c.b16 %v2177, %v2176
        %v2205 = vpack.c.b16 %v2179, %v2178
        %v2206 = vpack.c.b16 %v2181, %v2180
        %v2207 = vpack.c.b16 %v2183, %v2182
        %v2208 = vpack.c.b16 %v2185, %v2184
        %v2209 = vpack.c.b16 %v2187, %v2186
        %v2210 = vpack.c.b16 %v2189, %v2188
        %v2211 = vpack.c.b16 %v2191, %v2190
        %v2212 = vpack.c.b16 %v2193, %v2192
        %v2213 = vpack.c.b16 %v2195, %v2194
        %v2214 = vpack.c.b16 %v2197, %v2196
        %v2215 = vpack.c.b16 %v2199, %v2198
        %2232 = vmatprep.subr.bf16.mxu0 0
        %2233 = vmatpush1.bf16.msra.mxu0 %v2200
        %2234 = vmatprep.subr.bf16.mxu0 0
        %2235 = vmatpush1.bf16.msra.mxu0 %v2201
        %2236 = vmatprep.subr.bf16.mxu0 0
        %2237 = vmatpush1.bf16.msra.mxu0 %v2202
        %2238 = vmatprep.subr.bf16.mxu0 0
        %2239 = vmatpush1.bf16.msra.mxu0 %v2203
        %2240 = vmatprep.subr.bf16.mxu0 0
        %2241 = vmatpush1.bf16.msra.mxu0 %v2204
        %2242 = vmatprep.subr.bf16.mxu0 0
        %2243 = vmatpush1.bf16.msra.mxu0 %v2205
        %2244 = vmatprep.subr.bf16.mxu0 0
        %2245 = vmatpush1.bf16.msra.mxu0 %v2206
        %2246 = vmatprep.subr.bf16.mxu0 0
        %2247 = vmatpush1.bf16.msra.mxu0 %v2207
        %2248 = vmatprep.subr.bf16.mxu0 0
        %2249 = vmatpush1.bf16.msra.mxu0 %v2208
        %2250 = vmatprep.subr.bf16.mxu0 0
        %2251 = vmatpush1.bf16.msra.mxu0 %v2209
        %2252 = vmatprep.subr.bf16.mxu0 0
        %2253 = vmatpush1.bf16.msra.mxu0 %v2210
        %2254 = vmatprep.subr.bf16.mxu0 0
        %2255 = vmatpush1.bf16.msra.mxu0 %v2211
        %2256 = vmatprep.subr.bf16.mxu0 0
        %2257 = vmatpush1.bf16.msra.mxu0 %v2212
        %2258 = vmatprep.subr.bf16.mxu0 0
        %2259 = vmatpush1.bf16.msra.mxu0 %v2213
        %2260 = vmatprep.subr.bf16.mxu0 0
        %2261 = vmatpush1.bf16.msra.mxu0 %v2214
        %2262 = vmatprep.subr.bf16.mxu0 0
        %2263 = vmatpush1.bf16.msra.mxu0 %v2215
        %2264 = vmatprep.mubr.bf16.mxu0 %v2128
        %2265 = vmatmul.mubr.bf16.gmra.mrb[0].mxu0 %v2126
        %v2266 = vpop.f32.mrb[0].mxu0
        %v2267 = vpop.f32.mrb[0].mxu0
        %v2268 = vpop.f32.mrb[0].mxu0
        %v2269 = vpop.f32.mrb[0].mxu0
        %2270 = vmatprep.mubr.bf16.mxu0 %v2129
        %2271 = vmatmul.mubr.bf16.gmra.mrb[0].mxu0 %v2127
        %v2272 = vpop.f32.mrb[0].mxu0
        %v2273 = vadd.f32 %v2134, %v2272
        %v2274 = vpop.f32.mrb[0].mxu0
        %v2275 = vpop.f32.mrb[0].mxu0
        %v2276 = vpop.f32.mrb[0].mxu0
        %2277 = vdwg.mxu0
        %v2278 = vmax.f32 %v2273, 0.0
        %v2279 = vadd.f32 %v2278, %v1965
        %v2280 = vmax.f32 %v2279, 0.0
        %v2281 = vmul.f32 %v716, %v2280
        %v2282 = vld [vmem:[%s8] sm:$0x1]
        %v2284 = vlaneseq
        %v2285 = vshrl.u32 %v2284, 7
        %v2286 = vsub.s32 0, %v2285
        %v2287 = vrot.slane %v2282, %v2286
        %v2289 = vmul.f32 %v2281, %v2287
        %vm2290 = vcmask 1047559
        %v2291 = vsel %vm2290, %v2289, 0.0
        %2292 = vadd.xlane.f32.xlu0 %v2291
        %v2293 = vpop.xlane.xlu0 %2292
        %v2294 = vld [vmem:[#allocation3] sm:$0x1]
        %v2296 = vlaneseq
        %v2297 = vshrl.u32 %v2296, 7
        %v2298 = vsub.s32 0, %v2297
        %v2299 = vrot.slane %v2294, %v2298
        %v2301 = vadd.f32 %v2293, %v2299
        %v2302 = vxor.u32 %v2301, 2147483648
        %v2303 = vmul.f32 %v2302, 1.442695
        %v2304 = vpow.pop %v2303
        %v2305 = vadd.f32 %v2304, 1.0
        %v2306 = vrcp.pop %v2305
        %v2307 = vmul.f32 1.0, %v2306
        %2309 = vset.pattern.permute.xlu0 0
        %2310 = vperm.xlu0 %2309, %v2307
        %v2311 = vpop.permute.xlu0 %2310
        %2313 = vst [vmem:[%s398 - $0x7] sm:$0x80] %v2311
        %s2314 = sand.u32 %s251, 1
        %s2315 = scalar_lea.sflag [#allocation6], %s2314
        %s2316 = sand.u32 %s251, 1
        %s2317 = scalar_lea.vmem [#allocation10], %s2316
        // Predicated region
        $region73: #{tpu_custom_call.1} parent=59 // pred_check
          %p2318 = pneg %p261
        $region74: #{tpu_custom_call.1} parent=59 // pred_check_branch
          %2320 = sbr.rel (%p2318) target = $region76
        $region75: #{tpu_custom_call.1} parent=59 // pred_region
          %s2322 = ssub.s32 16, 16
          %2323 = vsyncadd %s2315, %s2322
          %s2324 = smul.addr %s28, 16
          %s2325 = scalar_lea.hbm %s10, %s2324
          %s2327 = sshll.u32 %s2317, 4
          %s2328 = int_to_ptr.vmem [resolvable:$true] %s2327
          %2330 = dma.vmem_to_hbm [thread:$0]  %s2328, 16, %s2325, %s2315
        $region76: #{tpu_custom_call.1} parent=59 // pred_fallthru
          _
      $region60: #{tpu_custom_call.1} parent=5 // pred_fallthru
        _
      %p2331 = scmp.le.s32.totalorder 2, %s23
      // Predicated region
      $region77: #{tpu_custom_call.1} parent=5 // pred_check
        %p2332 = pneg %p2331
      $region78: #{tpu_custom_call.1} parent=5 // pred_check_branch
        %2334 = sbr.rel (%p2332) target = $region80
      $region79: #{tpu_custom_call.1} parent=5 // pred_region
        %s2335 = ssub.s32 %s23, 2
        // Predicated region
        $region81: #{tpu_custom_call.1} parent=79 // pred_check
          %p2336 = pneg %p267
        $region82: #{tpu_custom_call.1} parent=79 // pred_check_branch
          %2338 = sbr.rel (%p2336) target = $region84
        $region83: #{tpu_custom_call.1} parent=79 // pred_region
          %s2339 = sand.u32 %s252, 1
          %s2340 = scalar_lea.sflag [#allocation6], %s2339
          %s2341 = sand.u32 %s252, 1
          %s2342 = scalar_lea.vmem [#allocation10], %s2341
          %2343 = dma.done %s2340, 16
        $region84: #{tpu_custom_call.1} parent=79 // pred_fallthru
          _
      $region80: #{tpu_custom_call.1} parent=5 // pred_fallthru
        _
    $region6: #{tpu_custom_call.1} parent=1 // loop_footer
      %s27 = sadd.s32 1, %s23
    $region7: #{tpu_custom_call.1} parent=1 // loop_footer_branch
      %22 = sbr.rel target = $region3
    $region8: #{tpu_custom_call.1} parent=1 // loop_exit
      _
    %2344 = vsyncpa [#allocation5], 1
    %s2345 = scalar_lea.sflag [#allocation5], 1
    %2346 = vsyncpa %s2345, 1
    %2347 = vsyncpa [#allocation8], 1
    %2348 = vsyncpa [#allocation6], 1
    %s2349 = scalar_lea.sflag [#allocation6], 1
    %2350 = vsyncpa %s2349, 1

</llo_original>
